<compile_context>
chip_gen: v6e
topology: v6e:2x2x1
jax: 0.10.0
libtpu: 0.0.40
codegen_flags: <defaults>
</compile_context>

<pallas_src>
import jax
import jax.numpy as jnp
from jax.experimental import pallas as pl
from jax.experimental.pallas import tpu as pltpu


def _leaky_relu(x):
    return jnp.where(x >= 0.0, x, 0.01 * x)


def _round_up(x, m):
    return (x + m - 1) // m * m


def _bnn_forward_kernel(
    x_ref,            # (tm, 784)            bf16
    eps_ref,          # (ns, tm, 3*H + C)    bf16
    w1m_ref,          # (784, H)             bf16
    w1v_ref,          # (784, H)             bf16  (dropout*scale)^2
    w2_ref, b2_ref,   # (2H, 2H) bf16, (1, 2H) f32   blockdiag[mean|var], [bm|bv]
    w3_ref, b3_ref,   # (2H, 2H) bf16, (1, 2H) f32
    w4_ref, b4_ref,   # (2H, 2C) bf16, (1, 2C) f32
    o_ref,            # (tm, ns*C)           f32
):
    h = w1m_ref.shape[1]
    ns = eps_ref.shape[0]
    c = b4_ref.shape[-1] // 2

    # ---- Sample-independent layer-1 moments: once per batch tile.
    x = x_ref[...]                                                  # bf16
    mean1 = jnp.dot(x, w1m_ref[...], preferred_element_type=jnp.float32)
    var1 = jnp.dot(x * x, w1v_ref[...], preferred_element_type=jnp.float32)
    std1 = jnp.sqrt(var1)

    w2 = w2_ref[...]
    b2 = b2_ref[...]
    w3 = w3_ref[...]
    b3 = b3_ref[...]
    w4 = w4_ref[...]
    b4 = b4_ref[...]

    def fused_layer(h_prev, w_bd, bias, eps, out_dim):
        # One MXU call computes [mean | var]:
        #   [h, h*h] @ blockdiag(W_mean, W_var) + [b_mean | b_var]
        # (the hidden bias-of-ones column is folded into the bias row).
        hb = h_prev.astype(jnp.bfloat16)
        lhs = jnp.concatenate([hb, hb * hb], axis=-1)               # (tm, 2*in)
        mv = jnp.dot(lhs, w_bd, preferred_element_type=jnp.float32) + bias
        mean = mv[:, :out_dim]
        var = mv[:, out_dim:]
        return mean + jnp.sqrt(var) * eps.astype(jnp.float32)

    # ---- Per-sample work, statically unrolled (n_samples is a trace-time
    # constant), all inside a single grid step: no per-sample launch overhead.
    for s in range(ns):
        eps_s = eps_ref[s]                                          # (tm, 3H+C)
        eps1 = eps_s[:, 0:h]
        eps2 = eps_s[:, h:2 * h]
        eps3 = eps_s[:, 2 * h:3 * h]
        eps4 = eps_s[:, 3 * h:3 * h + c]

        h1 = _leaky_relu(mean1 + std1 * eps1.astype(jnp.float32))
        h2 = _leaky_relu(fused_layer(h1, w2, b2, eps2, h))
        h3 = _leaky_relu(fused_layer(h2, w3, b3, eps3, h))
        pre4 = fused_layer(h3, w4, b4, eps4, c)

        # log_softmax (f32).
        m = jnp.max(pre4, axis=-1, keepdims=True)
        shifted = pre4 - m
        lse = jnp.log(jnp.sum(jnp.exp(shifted), axis=-1, keepdims=True))
        o_ref[:, s * c:(s + 1) * c] = (shifted - lse).astype(o_ref.dtype)


class BNN:
    """JAX/Pallas port of the PyTorch BNN's guide/forward (inference only)."""

    IN_FEATURES = 784  # 28 * 28, hard-coded in the reference module

    def __init__(self, n_hidden=32, n_classes=10, key=None, batch_tile=1024):
        self.n_hidden = n_hidden
        self.n_classes = n_classes
        self.batch_tile = batch_tile
        if key is None:
            key = jax.random.PRNGKey(0)
        k1, k2, k3, k4 = jax.random.split(key, 4)

        d, h = self.IN_FEATURES, n_hidden
        # Variational parameters (matching the guide's initializers).
        self.a1_mean = 0.01 * jax.random.normal(k1, (d, h), jnp.float32)
        self.a1_scale = 0.1 * jnp.ones((d, h), jnp.float32)
        self.a1_dropout = jnp.float32(0.25)

        self.a2_mean = 0.01 * jax.random.normal(k2, (h + 1, h), jnp.float32)
        self.a2_scale = 0.1 * jnp.ones((h + 1, h), jnp.float32)
        self.a2_dropout = jnp.float32(1.0)

        self.a3_mean = 0.01 * jax.random.normal(k3, (h + 1, h), jnp.float32)
        self.a3_scale = 0.1 * jnp.ones((h + 1, h), jnp.float32)
        self.a3_dropout = jnp.float32(1.0)

        self.a4_mean = 0.01 * jax.random.normal(k4, (h + 1, n_classes), jnp.float32)
        self.a4_scale = 0.1 * jnp.ones((h + 1, n_classes), jnp.float32)

        # Precompute kernel operands once (constant for inference).
        self._operands = self._kernel_operands()

    def _kernel_operands(self):
        def blockdiag(wm, wv):
            k, o = wm.shape
            z = jnp.zeros((k, o), jnp.float32)
            top = jnp.concatenate([wm, z], axis=1)
            bot = jnp.concatenate([z, wv], axis=1)
            return jnp.concatenate([top, bot], axis=0)               # (2k, 2o)

        def hidden(mean, scale, dropout):
            var = (dropout * scale) ** 2
            w = blockdiag(mean[:-1], var[:-1]).astype(jnp.bfloat16)  # (2in, 2out)
            b = jnp.concatenate([mean[-1:], var[-1:]], axis=-1)      # (1, 2out) f32
            return w, b.astype(jnp.float32)

        w1m = self.a1_mean.astype(jnp.bfloat16)
        w1v = ((self.a1_dropout * self.a1_scale) ** 2).astype(jnp.bfloat16)
        w2, b2 = hidden(self.a2_mean, self.a2_scale, self.a2_dropout)
        w3, b3 = hidden(self.a3_mean, self.a3_scale, self.a3_dropout)
        w4, b4 = hidden(self.a4_mean, self.a4_scale, jnp.float32(1.0))
        return (w1m, w1v, w2, b2, w3, b3, w4, b4)

    def forward(self, images, n_samples=10, key=None, return_noise=False):
        if key is None:
            key = jax.random.PRNGKey(1)
        x = images.reshape(-1, self.IN_FEATURES).astype(jnp.float32)
        n = x.shape[0]
        d, h, c = self.IN_FEATURES, self.n_hidden, self.n_classes
        e = 3 * h + c   # eps lanes: three hidden layers + output layer

        # Batch tiling: tile rows are a multiple of 8 (sublane); pad N to a
        # multiple of the tile. Padded zero rows produce finite outputs and
        # are sliced off at the end.
        tm = min(self.batch_tile, _round_up(n, 8))
        if n > 8 and _round_up(n, tm) // tm < 2:
            # v7x megacore: prefer >=2 "parallel" batch tiles when batch allows.
            tm = max(8, _round_up((n + 1) // 2, 8))
        n_pad = _round_up(n, tm)
        num_tiles = n_pad // tm
        if n_pad != n:
            x = jnp.pad(x, ((0, n_pad - n), (0, 0)))
        xb = x.astype(jnp.bfloat16)

        # Standard-normal noise for the local reparameterization: one
        # lane-dense draw per sample, consumed as a kernel input (bf16).
        eps = jax.random.normal(key, (n_samples, n_pad, e), jnp.bfloat16)

        resident = lambda i: (0, 0)   # weights stay resident in VMEM

        out = pl.pallas_call(
            _bnn_forward_kernel,
            out_shape=jax.ShapeDtypeStruct((n_pad, n_samples * c), jnp.float32),
            grid=(num_tiles,),
            in_specs=[
                pl.BlockSpec((tm, d), lambda i: (i, 0)),             # x tile
                pl.BlockSpec((n_samples, tm, e), lambda i: (0, i, 0)),  # eps tile
                pl.BlockSpec((d, h), resident),                      # w1 mean
                pl.BlockSpec((d, h), resident),                      # w1 var
                pl.BlockSpec((2 * h, 2 * h), resident),              # w2 blockdiag
                pl.BlockSpec((1, 2 * h), resident),                  # w2 bias
                pl.BlockSpec((2 * h, 2 * h), resident),              # w3 blockdiag
                pl.BlockSpec((1, 2 * h), resident),                  # w3 bias
                pl.BlockSpec((2 * h, 2 * c), resident),              # w4 blockdiag
                pl.BlockSpec((1, 2 * c), resident),                  # w4 bias
            ],
            out_specs=pl.BlockSpec((tm, n_samples * c), lambda i: (i, 0)),
            compiler_params=pltpu.CompilerParams(
                dimension_semantics=("parallel",),
                vmem_limit_bytes=32 * 1024 * 1024,
            ),
        )(xb, eps, *self._operands)

        # (n_pad, ns*c) -> (ns, N, c)
        logits = out.reshape(n_pad, n_samples, c).transpose(1, 0, 2)[:, :n, :]
        if return_noise:
            return logits, eps[:, :n, :].astype(jnp.float32)
        return logits


def _reference_forward(bnn_model, x, eps):
    """Pure-JAX f32 reference of the guide's stochastic forward pass."""
    h, c = bnn_model.n_hidden, bnn_model.n_classes
    w1m = bnn_model.a1_mean
    w1v = (bnn_model.a1_dropout * bnn_model.a1_scale) ** 2

    def hidden_params(mean, scale, dropout):
        var = (dropout * scale) ** 2
        return mean[:-1], mean[-1:], var[:-1], var[-1:]

    p2 = hidden_params(bnn_model.a2_mean, bnn_model.a2_scale, bnn_model.a2_dropout)
    p3 = hidden_params(bnn_model.a3_mean, bnn_model.a3_scale, bnn_model.a3_dropout)
    p4 = hidden_params(bnn_model.a4_mean, bnn_model.a4_scale, jnp.float32(1.0))

    def bayes(hp, wm, bm, wv, bv, e):
        mean = hp @ wm + bm
        var = (hp * hp) @ wv + bv
        return mean + jnp.sqrt(var) * e

    outs = []
    for s in range(eps.shape[0]):
        es = eps[s]
        e1 = es[:, :h]
        e2 = es[:, h:2 * h]
        e3 = es[:, 2 * h:3 * h]
        e4 = es[:, 3 * h:3 * h + c]
        h1 = _leaky_relu(x @ w1m + jnp.sqrt((x * x) @ w1v) * e1)
        h2 = _leaky_relu(bayes(h1, *p2, e2))
        h3 = _leaky_relu(bayes(h2, *p3, e3))
        pre4 = bayes(h3, *p4, e4)
        outs.append(jax.nn.log_softmax(pre4, axis=-1))
    return jnp.stack(outs, axis=0)


if __name__ == "__main__":
    # Small deterministic example: batch=2, MNIST-shaped NCHW images.
    key = jax.random.PRNGKey(0)
    k_img, k_params, k_fwd = jax.random.split(key, 3)
    images = jax.random.normal(k_img, (2, 1, 28, 28), jnp.float32)

    bnn_model = BNN(n_hidden=32, n_classes=10, key=k_params)
    out, eps = bnn_model.forward(images, n_samples=3, key=k_fwd, return_noise=True)
    out = jax.block_until_ready(out)

    assert out.shape == (3, 2, 10), out.shape
    assert bool(jnp.all(jnp.isfinite(out)))
    # log-softmax rows should exponentiate-sum to (approximately) 1.
    probs_sum = jnp.sum(jnp.exp(out), axis=-1)
    assert bool(jnp.all(jnp.abs(probs_sum - 1.0) < 1e-4))

    # Compare against a pure-JAX f32 reference using the same noise
    # (bf16 matmul operands -> loose tolerance).
    x_flat = images.reshape(-1, BNN.IN_FEATURES).astype(jnp.float32)
    ref = _reference_forward(bnn_model, x_flat, eps)
    max_err = float(jnp.max(jnp.abs(out - ref)))
    assert max_err < 5e-2, max_err

    print("KERNEL_OK")
</pallas_src>

<mosaic_0001>
module attributes {stable_mosaic.version = 11 : i64} {
  func.func @_bnn_forward_kernel(%arg0: i32, %arg1: memref<8x784xbf16, #tpu.memory_space<vmem>>, %arg2: memref<3x8x106xbf16, #tpu.memory_space<vmem>>, %arg3: memref<784x32xbf16, #tpu.memory_space<vmem>>, %arg4: memref<784x32xbf16, #tpu.memory_space<vmem>>, %arg5: memref<64x64xbf16, #tpu.memory_space<vmem>>, %arg6: memref<1x64xf32, #tpu.memory_space<vmem>>, %arg7: memref<64x64xbf16, #tpu.memory_space<vmem>>, %arg8: memref<1x64xf32, #tpu.memory_space<vmem>>, %arg9: memref<64x20xbf16, #tpu.memory_space<vmem>>, %arg10: memref<1x20xf32, #tpu.memory_space<vmem>>, %arg11: memref<8x30xf32, #tpu.memory_space<vmem>>) attributes {dimension_semantics = [#tpu.dimension_semantics<parallel>], iteration_bounds = array<i64: 1>, scalar_prefetch = 0 : i64, scratch_operands = 0 : i64, tpu.core_type = #tpu.core_type<tc>, window_params = [{transform_indices = @transform_0, window_bounds = array<i64: 8, 784>}, {transform_indices = @transform_1, window_bounds = array<i64: 3, 8, 106>}, {pipeline_mode = #tpu.pipeline_mode<synchronous>, transform_indices = @transform_2, window_bounds = array<i64: 784, 32>}, {pipeline_mode = #tpu.pipeline_mode<synchronous>, transform_indices = @transform_3, window_bounds = array<i64: 784, 32>}, {pipeline_mode = #tpu.pipeline_mode<synchronous>, transform_indices = @transform_4, window_bounds = array<i64: 64, 64>}, {pipeline_mode = #tpu.pipeline_mode<synchronous>, transform_indices = @transform_5, window_bounds = array<i64: 1, 64>}, {pipeline_mode = #tpu.pipeline_mode<synchronous>, transform_indices = @transform_6, window_bounds = array<i64: 64, 64>}, {pipeline_mode = #tpu.pipeline_mode<synchronous>, transform_indices = @transform_7, window_bounds = array<i64: 1, 64>}, {pipeline_mode = #tpu.pipeline_mode<synchronous>, transform_indices = @transform_8, window_bounds = array<i64: 64, 20>}, {pipeline_mode = #tpu.pipeline_mode<synchronous>, transform_indices = @transform_9, window_bounds = array<i64: 1, 20>}, {transform_indices = @transform_10, window_bounds = array<i64: 8, 30>}]} {
    %c0 = arith.constant 0 : index
    %c0_0 = arith.constant 0 : index
    %0 = vector.load %arg1[%c0, %c0_0] : memref<8x784xbf16, #tpu.memory_space<vmem>>, vector<8x784xbf16>
    %c0_1 = arith.constant 0 : index
    %c0_2 = arith.constant 0 : index
    %1 = vector.load %arg3[%c0_1, %c0_2] : memref<784x32xbf16, #tpu.memory_space<vmem>>, vector<784x32xbf16>
    %cst = arith.constant dense<0.000000e+00> : vector<8x32xf32>
    %2 = tpu.matmul %0, %1, %cst {dimension_numbers = #tpu.dot_dimension_numbers<[1], [0], [0], [1], [0, 0, 1, 1], [], []>} : vector<8x784xbf16>, vector<784x32xbf16>, vector<8x32xf32> -> vector<8x32xf32>
    %3 = arith.mulf %0, %0 : vector<8x784xbf16>
    %c0_3 = arith.constant 0 : index
    %c0_4 = arith.constant 0 : index
    %4 = vector.load %arg4[%c0_3, %c0_4] : memref<784x32xbf16, #tpu.memory_space<vmem>>, vector<784x32xbf16>
    %cst_5 = arith.constant dense<0.000000e+00> : vector<8x32xf32>
    %5 = tpu.matmul %3, %4, %cst_5 {dimension_numbers = #tpu.dot_dimension_numbers<[1], [0], [0], [1], [0, 0, 1, 1], [], []>} : vector<8x784xbf16>, vector<784x32xbf16>, vector<8x32xf32> -> vector<8x32xf32>
    %6 = math.sqrt %5 : vector<8x32xf32>
    %c0_6 = arith.constant 0 : index
    %c0_7 = arith.constant 0 : index
    %7 = vector.load %arg5[%c0_6, %c0_7] : memref<64x64xbf16, #tpu.memory_space<vmem>>, vector<64x64xbf16>
    %c0_8 = arith.constant 0 : index
    %c0_9 = arith.constant 0 : index
    %8 = vector.load %arg6[%c0_8, %c0_9] : memref<1x64xf32, #tpu.memory_space<vmem>>, vector<1x64xf32>
    %c0_10 = arith.constant 0 : index
    %c0_11 = arith.constant 0 : index
    %9 = vector.load %arg7[%c0_10, %c0_11] : memref<64x64xbf16, #tpu.memory_space<vmem>>, vector<64x64xbf16>
    %c0_12 = arith.constant 0 : index
    %c0_13 = arith.constant 0 : index
    %10 = vector.load %arg8[%c0_12, %c0_13] : memref<1x64xf32, #tpu.memory_space<vmem>>, vector<1x64xf32>
    %c0_14 = arith.constant 0 : index
    %c0_15 = arith.constant 0 : index
    %11 = vector.load %arg9[%c0_14, %c0_15] : memref<64x20xbf16, #tpu.memory_space<vmem>>, vector<64x20xbf16>
    %c0_16 = arith.constant 0 : index
    %c0_17 = arith.constant 0 : index
    %12 = vector.load %arg10[%c0_16, %c0_17] : memref<1x20xf32, #tpu.memory_space<vmem>>, vector<1x20xf32>
    %c0_18 = arith.constant 0 : index
    %c0_19 = arith.constant 0 : index
    %c0_20 = arith.constant 0 : index
    %13 = vector.load %arg2[%c0_18, %c0_19, %c0_20] : memref<3x8x106xbf16, #tpu.memory_space<vmem>>, vector<1x8x106xbf16>
    %14 = vector.shape_cast %13 : vector<1x8x106xbf16> to vector<8x106xbf16>
    %15 = vector.extract_strided_slice %14 {offsets = [0, 0], sizes = [8, 32], strides = [1, 1]} : vector<8x106xbf16> to vector<8x32xbf16>
    %16 = vector.extract_strided_slice %14 {offsets = [0, 32], sizes = [8, 32], strides = [1, 1]} : vector<8x106xbf16> to vector<8x32xbf16>
    %17 = vector.extract_strided_slice %14 {offsets = [0, 64], sizes = [8, 32], strides = [1, 1]} : vector<8x106xbf16> to vector<8x32xbf16>
    %18 = vector.extract_strided_slice %14 {offsets = [0, 96], sizes = [8, 10], strides = [1, 1]} : vector<8x106xbf16> to vector<8x10xbf16>
    %19 = arith.extf %15 : vector<8x32xbf16> to vector<8x32xf32>
    %20 = arith.mulf %6, %19 : vector<8x32xf32>
    %21 = arith.addf %2, %20 : vector<8x32xf32>
    %cst_21 = arith.constant 0.000000e+00 : f32
    %22 = vector.broadcast %cst_21 : f32 to vector<8x32xf32>
    %23 = arith.cmpf oge, %21, %22 : vector<8x32xf32>
    %cst_22 = arith.constant 0.00999999977 : f32
    %24 = vector.broadcast %cst_22 : f32 to vector<8x32xf32>
    %25 = arith.mulf %24, %21 : vector<8x32xf32>
    %26 = arith.select %23, %21, %25 : vector<8x32xi1>, vector<8x32xf32>
    %27 = arith.truncf %26 : vector<8x32xf32> to vector<8x32xbf16>
    %28 = arith.mulf %27, %27 : vector<8x32xbf16>
    %29 = tpu.concatenate %27, %28 in 1 : vector<8x32xbf16>, vector<8x32xbf16> -> vector<8x64xbf16>
    %cst_23 = arith.constant dense<0.000000e+00> : vector<8x64xf32>
    %30 = tpu.matmul %29, %7, %cst_23 {dimension_numbers = #tpu.dot_dimension_numbers<[1], [0], [0], [1], [0, 0, 1, 1], [], []>} : vector<8x64xbf16>, vector<64x64xbf16>, vector<8x64xf32> -> vector<8x64xf32>
    %31 = vector.broadcast %8 : vector<1x64xf32> to vector<8x64xf32>
    %32 = arith.addf %30, %31 : vector<8x64xf32>
    %33 = vector.extract_strided_slice %32 {offsets = [0, 0], sizes = [8, 32], strides = [1, 1]} : vector<8x64xf32> to vector<8x32xf32>
    %34 = vector.extract_strided_slice %32 {offsets = [0, 32], sizes = [8, 32], strides = [1, 1]} : vector<8x64xf32> to vector<8x32xf32>
    %35 = math.sqrt %34 : vector<8x32xf32>
    %36 = arith.extf %16 : vector<8x32xbf16> to vector<8x32xf32>
    %37 = arith.mulf %35, %36 : vector<8x32xf32>
    %38 = arith.addf %33, %37 : vector<8x32xf32>
    %cst_24 = arith.constant 0.000000e+00 : f32
    %39 = vector.broadcast %cst_24 : f32 to vector<8x32xf32>
    %40 = arith.cmpf oge, %38, %39 : vector<8x32xf32>
    %cst_25 = arith.constant 0.00999999977 : f32
    %41 = vector.broadcast %cst_25 : f32 to vector<8x32xf32>
    %42 = arith.mulf %41, %38 : vector<8x32xf32>
    %43 = arith.select %40, %38, %42 : vector<8x32xi1>, vector<8x32xf32>
    %44 = arith.truncf %43 : vector<8x32xf32> to vector<8x32xbf16>
    %45 = arith.mulf %44, %44 : vector<8x32xbf16>
    %46 = tpu.concatenate %44, %45 in 1 : vector<8x32xbf16>, vector<8x32xbf16> -> vector<8x64xbf16>
    %cst_26 = arith.constant dense<0.000000e+00> : vector<8x64xf32>
    %47 = tpu.matmul %46, %9, %cst_26 {dimension_numbers = #tpu.dot_dimension_numbers<[1], [0], [0], [1], [0, 0, 1, 1], [], []>} : vector<8x64xbf16>, vector<64x64xbf16>, vector<8x64xf32> -> vector<8x64xf32>
    %48 = vector.broadcast %10 : vector<1x64xf32> to vector<8x64xf32>
    %49 = arith.addf %47, %48 : vector<8x64xf32>
    %50 = vector.extract_strided_slice %49 {offsets = [0, 0], sizes = [8, 32], strides = [1, 1]} : vector<8x64xf32> to vector<8x32xf32>
    %51 = vector.extract_strided_slice %49 {offsets = [0, 32], sizes = [8, 32], strides = [1, 1]} : vector<8x64xf32> to vector<8x32xf32>
    %52 = math.sqrt %51 : vector<8x32xf32>
    %53 = arith.extf %17 : vector<8x32xbf16> to vector<8x32xf32>
    %54 = arith.mulf %52, %53 : vector<8x32xf32>
    %55 = arith.addf %50, %54 : vector<8x32xf32>
    %cst_27 = arith.constant 0.000000e+00 : f32
    %56 = vector.broadcast %cst_27 : f32 to vector<8x32xf32>
    %57 = arith.cmpf oge, %55, %56 : vector<8x32xf32>
    %cst_28 = arith.constant 0.00999999977 : f32
    %58 = vector.broadcast %cst_28 : f32 to vector<8x32xf32>
    %59 = arith.mulf %58, %55 : vector<8x32xf32>
    %60 = arith.select %57, %55, %59 : vector<8x32xi1>, vector<8x32xf32>
    %61 = arith.truncf %60 : vector<8x32xf32> to vector<8x32xbf16>
    %62 = arith.mulf %61, %61 : vector<8x32xbf16>
    %63 = tpu.concatenate %61, %62 in 1 : vector<8x32xbf16>, vector<8x32xbf16> -> vector<8x64xbf16>
    %cst_29 = arith.constant dense<0.000000e+00> : vector<8x20xf32>
    %64 = tpu.matmul %63, %11, %cst_29 {dimension_numbers = #tpu.dot_dimension_numbers<[1], [0], [0], [1], [0, 0, 1, 1], [], []>} : vector<8x64xbf16>, vector<64x20xbf16>, vector<8x20xf32> -> vector<8x20xf32>
    %65 = vector.broadcast %12 : vector<1x20xf32> to vector<8x20xf32>
    %66 = arith.addf %64, %65 : vector<8x20xf32>
    %67 = vector.extract_strided_slice %66 {offsets = [0, 0], sizes = [8, 10], strides = [1, 1]} : vector<8x20xf32> to vector<8x10xf32>
    %68 = vector.extract_strided_slice %66 {offsets = [0, 10], sizes = [8, 10], strides = [1, 1]} : vector<8x20xf32> to vector<8x10xf32>
    %69 = math.sqrt %68 : vector<8x10xf32>
    %70 = arith.extf %18 : vector<8x10xbf16> to vector<8x10xf32>
    %71 = arith.mulf %69, %70 : vector<8x10xf32>
    %72 = arith.addf %67, %71 : vector<8x10xf32>
    %cst_30 = arith.constant dense<0xFF800000> : vector<8xf32>
    %73 = vector.multi_reduction <maximumf>, %72, %cst_30 [1] : vector<8x10xf32> to vector<8xf32>
    %74 = vector.shape_cast %73 : vector<8xf32> to vector<8x1xf32>
    %75 = vector.broadcast %74 : vector<8x1xf32> to vector<8x10xf32>
    %76 = arith.subf %72, %75 : vector<8x10xf32>
    %77 = math.exp %76 : vector<8x10xf32>
    %cst_31 = arith.constant dense<0.000000e+00> : vector<8xf32>
    %78 = vector.multi_reduction <add>, %77, %cst_31 [1] : vector<8x10xf32> to vector<8xf32>
    %79 = vector.shape_cast %78 : vector<8xf32> to vector<8x1xf32>
    %80 = math.log %79 : vector<8x1xf32>
    %81 = vector.broadcast %80 : vector<8x1xf32> to vector<8x10xf32>
    %82 = arith.subf %76, %81 : vector<8x10xf32>
    %c0_32 = arith.constant 0 : index
    %c0_33 = arith.constant 0 : index
    %83 = vector.load %arg11[%c0_32, %c0_33] : memref<8x30xf32, #tpu.memory_space<vmem>>, vector<8x10xf32>
    tpu.vector_store %arg11[%c0_32, %c0_33], %82 {strides = array<i32>} : memref<8x30xf32, #tpu.memory_space<vmem>>, vector<8x10xf32>,
    %c1 = arith.constant 1 : index
    %c0_34 = arith.constant 0 : index
    %c0_35 = arith.constant 0 : index
    %84 = vector.load %arg2[%c1, %c0_34, %c0_35] : memref<3x8x106xbf16, #tpu.memory_space<vmem>>, vector<1x8x106xbf16>
    %85 = vector.shape_cast %84 : vector<1x8x106xbf16> to vector<8x106xbf16>
    %86 = vector.extract_strided_slice %85 {offsets = [0, 0], sizes = [8, 32], strides = [1, 1]} : vector<8x106xbf16> to vector<8x32xbf16>
    %87 = vector.extract_strided_slice %85 {offsets = [0, 32], sizes = [8, 32], strides = [1, 1]} : vector<8x106xbf16> to vector<8x32xbf16>
    %88 = vector.extract_strided_slice %85 {offsets = [0, 64], sizes = [8, 32], strides = [1, 1]} : vector<8x106xbf16> to vector<8x32xbf16>
    %89 = vector.extract_strided_slice %85 {offsets = [0, 96], sizes = [8, 10], strides = [1, 1]} : vector<8x106xbf16> to vector<8x10xbf16>
    %90 = arith.extf %86 : vector<8x32xbf16> to vector<8x32xf32>
    %91 = arith.mulf %6, %90 : vector<8x32xf32>
    %92 = arith.addf %2, %91 : vector<8x32xf32>
    %cst_36 = arith.constant 0.000000e+00 : f32
    %93 = vector.broadcast %cst_36 : f32 to vector<8x32xf32>
    %94 = arith.cmpf oge, %92, %93 : vector<8x32xf32>
    %cst_37 = arith.constant 0.00999999977 : f32
    %95 = vector.broadcast %cst_37 : f32 to vector<8x32xf32>
    %96 = arith.mulf %95, %92 : vector<8x32xf32>
    %97 = arith.select %94, %92, %96 : vector<8x32xi1>, vector<8x32xf32>
    %98 = arith.truncf %97 : vector<8x32xf32> to vector<8x32xbf16>
    %99 = arith.mulf %98, %98 : vector<8x32xbf16>
    %100 = tpu.concatenate %98, %99 in 1 : vector<8x32xbf16>, vector<8x32xbf16> -> vector<8x64xbf16>
    %cst_38 = arith.constant dense<0.000000e+00> : vector<8x64xf32>
    %101 = tpu.matmul %100, %7, %cst_38 {dimension_numbers = #tpu.dot_dimension_numbers<[1], [0], [0], [1], [0, 0, 1, 1], [], []>} : vector<8x64xbf16>, vector<64x64xbf16>, vector<8x64xf32> -> vector<8x64xf32>
    %102 = vector.broadcast %8 : vector<1x64xf32> to vector<8x64xf32>
    %103 = arith.addf %101, %102 : vector<8x64xf32>
    %104 = vector.extract_strided_slice %103 {offsets = [0, 0], sizes = [8, 32], strides = [1, 1]} : vector<8x64xf32> to vector<8x32xf32>
    %105 = vector.extract_strided_slice %103 {offsets = [0, 32], sizes = [8, 32], strides = [1, 1]} : vector<8x64xf32> to vector<8x32xf32>
    %106 = math.sqrt %105 : vector<8x32xf32>
    %107 = arith.extf %87 : vector<8x32xbf16> to vector<8x32xf32>
    %108 = arith.mulf %106, %107 : vector<8x32xf32>
    %109 = arith.addf %104, %108 : vector<8x32xf32>
    %cst_39 = arith.constant 0.000000e+00 : f32
    %110 = vector.broadcast %cst_39 : f32 to vector<8x32xf32>
    %111 = arith.cmpf oge, %109, %110 : vector<8x32xf32>
    %cst_40 = arith.constant 0.00999999977 : f32
    %112 = vector.broadcast %cst_40 : f32 to vector<8x32xf32>
    %113 = arith.mulf %112, %109 : vector<8x32xf32>
    %114 = arith.select %111, %109, %113 : vector<8x32xi1>, vector<8x32xf32>
    %115 = arith.truncf %114 : vector<8x32xf32> to vector<8x32xbf16>
    %116 = arith.mulf %115, %115 : vector<8x32xbf16>
    %117 = tpu.concatenate %115, %116 in 1 : vector<8x32xbf16>, vector<8x32xbf16> -> vector<8x64xbf16>
    %cst_41 = arith.constant dense<0.000000e+00> : vector<8x64xf32>
    %118 = tpu.matmul %117, %9, %cst_41 {dimension_numbers = #tpu.dot_dimension_numbers<[1], [0], [0], [1], [0, 0, 1, 1], [], []>} : vector<8x64xbf16>, vector<64x64xbf16>, vector<8x64xf32> -> vector<8x64xf32>
    %119 = vector.broadcast %10 : vector<1x64xf32> to vector<8x64xf32>
    %120 = arith.addf %118, %119 : vector<8x64xf32>
    %121 = vector.extract_strided_slice %120 {offsets = [0, 0], sizes = [8, 32], strides = [1, 1]} : vector<8x64xf32> to vector<8x32xf32>
    %122 = vector.extract_strided_slice %120 {offsets = [0, 32], sizes = [8, 32], strides = [1, 1]} : vector<8x64xf32> to vector<8x32xf32>
    %123 = math.sqrt %122 : vector<8x32xf32>
    %124 = arith.extf %88 : vector<8x32xbf16> to vector<8x32xf32>
    %125 = arith.mulf %123, %124 : vector<8x32xf32>
    %126 = arith.addf %121, %125 : vector<8x32xf32>
    %cst_42 = arith.constant 0.000000e+00 : f32
    %127 = vector.broadcast %cst_42 : f32 to vector<8x32xf32>
    %128 = arith.cmpf oge, %126, %127 : vector<8x32xf32>
    %cst_43 = arith.constant 0.00999999977 : f32
    %129 = vector.broadcast %cst_43 : f32 to vector<8x32xf32>
    %130 = arith.mulf %129, %126 : vector<8x32xf32>
    %131 = arith.select %128, %126, %130 : vector<8x32xi1>, vector<8x32xf32>
    %132 = arith.truncf %131 : vector<8x32xf32> to vector<8x32xbf16>
    %133 = arith.mulf %132, %132 : vector<8x32xbf16>
    %134 = tpu.concatenate %132, %133 in 1 : vector<8x32xbf16>, vector<8x32xbf16> -> vector<8x64xbf16>
    %cst_44 = arith.constant dense<0.000000e+00> : vector<8x20xf32>
    %135 = tpu.matmul %134, %11, %cst_44 {dimension_numbers = #tpu.dot_dimension_numbers<[1], [0], [0], [1], [0, 0, 1, 1], [], []>} : vector<8x64xbf16>, vector<64x20xbf16>, vector<8x20xf32> -> vector<8x20xf32>
    %136 = vector.broadcast %12 : vector<1x20xf32> to vector<8x20xf32>
    %137 = arith.addf %135, %136 : vector<8x20xf32>
    %138 = vector.extract_strided_slice %137 {offsets = [0, 0], sizes = [8, 10], strides = [1, 1]} : vector<8x20xf32> to vector<8x10xf32>
    %139 = vector.extract_strided_slice %137 {offsets = [0, 10], sizes = [8, 10], strides = [1, 1]} : vector<8x20xf32> to vector<8x10xf32>
    %140 = math.sqrt %139 : vector<8x10xf32>
    %141 = arith.extf %89 : vector<8x10xbf16> to vector<8x10xf32>
    %142 = arith.mulf %140, %141 : vector<8x10xf32>
    %143 = arith.addf %138, %142 : vector<8x10xf32>
    %cst_45 = arith.constant dense<0xFF800000> : vector<8xf32>
    %144 = vector.multi_reduction <maximumf>, %143, %cst_45 [1] : vector<8x10xf32> to vector<8xf32>
    %145 = vector.shape_cast %144 : vector<8xf32> to vector<8x1xf32>
    %146 = vector.broadcast %145 : vector<8x1xf32> to vector<8x10xf32>
    %147 = arith.subf %143, %146 : vector<8x10xf32>
    %148 = math.exp %147 : vector<8x10xf32>
    %cst_46 = arith.constant dense<0.000000e+00> : vector<8xf32>
    %149 = vector.multi_reduction <add>, %148, %cst_46 [1] : vector<8x10xf32> to vector<8xf32>
    %150 = vector.shape_cast %149 : vector<8xf32> to vector<8x1xf32>
    %151 = math.log %150 : vector<8x1xf32>
    %152 = vector.broadcast %151 : vector<8x1xf32> to vector<8x10xf32>
    %153 = arith.subf %147, %152 : vector<8x10xf32>
    %c0_47 = arith.constant 0 : index
    %c10 = arith.constant 10 : index
    %154 = vector.load %arg11[%c0_47, %c10] : memref<8x30xf32, #tpu.memory_space<vmem>>, vector<8x10xf32>
    tpu.vector_store %arg11[%c0_47, %c10], %153 {strides = array<i32>} : memref<8x30xf32, #tpu.memory_space<vmem>>, vector<8x10xf32>,
    %c2 = arith.constant 2 : index
    %c0_48 = arith.constant 0 : index
    %c0_49 = arith.constant 0 : index
    %155 = vector.load %arg2[%c2, %c0_48, %c0_49] : memref<3x8x106xbf16, #tpu.memory_space<vmem>>, vector<1x8x106xbf16>
    %156 = vector.shape_cast %155 : vector<1x8x106xbf16> to vector<8x106xbf16>
    %157 = vector.extract_strided_slice %156 {offsets = [0, 0], sizes = [8, 32], strides = [1, 1]} : vector<8x106xbf16> to vector<8x32xbf16>
    %158 = vector.extract_strided_slice %156 {offsets = [0, 32], sizes = [8, 32], strides = [1, 1]} : vector<8x106xbf16> to vector<8x32xbf16>
    %159 = vector.extract_strided_slice %156 {offsets = [0, 64], sizes = [8, 32], strides = [1, 1]} : vector<8x106xbf16> to vector<8x32xbf16>
    %160 = vector.extract_strided_slice %156 {offsets = [0, 96], sizes = [8, 10], strides = [1, 1]} : vector<8x106xbf16> to vector<8x10xbf16>
    %161 = arith.extf %157 : vector<8x32xbf16> to vector<8x32xf32>
    %162 = arith.mulf %6, %161 : vector<8x32xf32>
    %163 = arith.addf %2, %162 : vector<8x32xf32>
    %cst_50 = arith.constant 0.000000e+00 : f32
    %164 = vector.broadcast %cst_50 : f32 to vector<8x32xf32>
    %165 = arith.cmpf oge, %163, %164 : vector<8x32xf32>
    %cst_51 = arith.constant 0.00999999977 : f32
    %166 = vector.broadcast %cst_51 : f32 to vector<8x32xf32>
    %167 = arith.mulf %166, %163 : vector<8x32xf32>
    %168 = arith.select %165, %163, %167 : vector<8x32xi1>, vector<8x32xf32>
    %169 = arith.truncf %168 : vector<8x32xf32> to vector<8x32xbf16>
    %170 = arith.mulf %169, %169 : vector<8x32xbf16>
    %171 = tpu.concatenate %169, %170 in 1 : vector<8x32xbf16>, vector<8x32xbf16> -> vector<8x64xbf16>
    %cst_52 = arith.constant dense<0.000000e+00> : vector<8x64xf32>
    %172 = tpu.matmul %171, %7, %cst_52 {dimension_numbers = #tpu.dot_dimension_numbers<[1], [0], [0], [1], [0, 0, 1, 1], [], []>} : vector<8x64xbf16>, vector<64x64xbf16>, vector<8x64xf32> -> vector<8x64xf32>
    %173 = vector.broadcast %8 : vector<1x64xf32> to vector<8x64xf32>
    %174 = arith.addf %172, %173 : vector<8x64xf32>
    %175 = vector.extract_strided_slice %174 {offsets = [0, 0], sizes = [8, 32], strides = [1, 1]} : vector<8x64xf32> to vector<8x32xf32>
    %176 = vector.extract_strided_slice %174 {offsets = [0, 32], sizes = [8, 32], strides = [1, 1]} : vector<8x64xf32> to vector<8x32xf32>
    %177 = math.sqrt %176 : vector<8x32xf32>
    %178 = arith.extf %158 : vector<8x32xbf16> to vector<8x32xf32>
    %179 = arith.mulf %177, %178 : vector<8x32xf32>
    %180 = arith.addf %175, %179 : vector<8x32xf32>
    %cst_53 = arith.constant 0.000000e+00 : f32
    %181 = vector.broadcast %cst_53 : f32 to vector<8x32xf32>
    %182 = arith.cmpf oge, %180, %181 : vector<8x32xf32>
    %cst_54 = arith.constant 0.00999999977 : f32
    %183 = vector.broadcast %cst_54 : f32 to vector<8x32xf32>
    %184 = arith.mulf %183, %180 : vector<8x32xf32>
    %185 = arith.select %182, %180, %184 : vector<8x32xi1>, vector<8x32xf32>
    %186 = arith.truncf %185 : vector<8x32xf32> to vector<8x32xbf16>
    %187 = arith.mulf %186, %186 : vector<8x32xbf16>
    %188 = tpu.concatenate %186, %187 in 1 : vector<8x32xbf16>, vector<8x32xbf16> -> vector<8x64xbf16>
    %cst_55 = arith.constant dense<0.000000e+00> : vector<8x64xf32>
    %189 = tpu.matmul %188, %9, %cst_55 {dimension_numbers = #tpu.dot_dimension_numbers<[1], [0], [0], [1], [0, 0, 1, 1], [], []>} : vector<8x64xbf16>, vector<64x64xbf16>, vector<8x64xf32> -> vector<8x64xf32>
    %190 = vector.broadcast %10 : vector<1x64xf32> to vector<8x64xf32>
    %191 = arith.addf %189, %190 : vector<8x64xf32>
    %192 = vector.extract_strided_slice %191 {offsets = [0, 0], sizes = [8, 32], strides = [1, 1]} : vector<8x64xf32> to vector<8x32xf32>
    %193 = vector.extract_strided_slice %191 {offsets = [0, 32], sizes = [8, 32], strides = [1, 1]} : vector<8x64xf32> to vector<8x32xf32>
    %194 = math.sqrt %193 : vector<8x32xf32>
    %195 = arith.extf %159 : vector<8x32xbf16> to vector<8x32xf32>
    %196 = arith.mulf %194, %195 : vector<8x32xf32>
    %197 = arith.addf %192, %196 : vector<8x32xf32>
    %cst_56 = arith.constant 0.000000e+00 : f32
    %198 = vector.broadcast %cst_56 : f32 to vector<8x32xf32>
    %199 = arith.cmpf oge, %197, %198 : vector<8x32xf32>
    %cst_57 = arith.constant 0.00999999977 : f32
    %200 = vector.broadcast %cst_57 : f32 to vector<8x32xf32>
    %201 = arith.mulf %200, %197 : vector<8x32xf32>
    %202 = arith.select %199, %197, %201 : vector<8x32xi1>, vector<8x32xf32>
    %203 = arith.truncf %202 : vector<8x32xf32> to vector<8x32xbf16>
    %204 = arith.mulf %203, %203 : vector<8x32xbf16>
    %205 = tpu.concatenate %203, %204 in 1 : vector<8x32xbf16>, vector<8x32xbf16> -> vector<8x64xbf16>
    %cst_58 = arith.constant dense<0.000000e+00> : vector<8x20xf32>
    %206 = tpu.matmul %205, %11, %cst_58 {dimension_numbers = #tpu.dot_dimension_numbers<[1], [0], [0], [1], [0, 0, 1, 1], [], []>} : vector<8x64xbf16>, vector<64x20xbf16>, vector<8x20xf32> -> vector<8x20xf32>
    %207 = vector.broadcast %12 : vector<1x20xf32> to vector<8x20xf32>
    %208 = arith.addf %206, %207 : vector<8x20xf32>
    %209 = vector.extract_strided_slice %208 {offsets = [0, 0], sizes = [8, 10], strides = [1, 1]} : vector<8x20xf32> to vector<8x10xf32>
    %210 = vector.extract_strided_slice %208 {offsets = [0, 10], sizes = [8, 10], strides = [1, 1]} : vector<8x20xf32> to vector<8x10xf32>
    %211 = math.sqrt %210 : vector<8x10xf32>
    %212 = arith.extf %160 : vector<8x10xbf16> to vector<8x10xf32>
    %213 = arith.mulf %211, %212 : vector<8x10xf32>
    %214 = arith.addf %209, %213 : vector<8x10xf32>
    %cst_59 = arith.constant dense<0xFF800000> : vector<8xf32>
    %215 = vector.multi_reduction <maximumf>, %214, %cst_59 [1] : vector<8x10xf32> to vector<8xf32>
    %216 = vector.shape_cast %215 : vector<8xf32> to vector<8x1xf32>
    %217 = vector.broadcast %216 : vector<8x1xf32> to vector<8x10xf32>
    %218 = arith.subf %214, %217 : vector<8x10xf32>
    %219 = math.exp %218 : vector<8x10xf32>
    %cst_60 = arith.constant dense<0.000000e+00> : vector<8xf32>
    %220 = vector.multi_reduction <add>, %219, %cst_60 [1] : vector<8x10xf32> to vector<8xf32>
    %221 = vector.shape_cast %220 : vector<8xf32> to vector<8x1xf32>
    %222 = math.log %221 : vector<8x1xf32>
    %223 = vector.broadcast %222 : vector<8x1xf32> to vector<8x10xf32>
    %224 = arith.subf %218, %223 : vector<8x10xf32>
    %c0_61 = arith.constant 0 : index
    %c20 = arith.constant 20 : index
    %225 = vector.load %arg11[%c0_61, %c20] : memref<8x30xf32, #tpu.memory_space<vmem>>, vector<8x10xf32>
    tpu.vector_store %arg11[%c0_61, %c20], %224 {strides = array<i32>} : memref<8x30xf32, #tpu.memory_space<vmem>>, vector<8x10xf32>,
    return
  }
  func.func @transform_0(%arg0: i32) -> (i32, i32) {
    %c0_i32 = arith.constant 0 : i32
    %c0_i32_0 = arith.constant 0 : i32
    return %arg0, %c0_i32 : i32, i32
  }
  func.func @transform_1(%arg0: i32) -> (i32, i32, i32) {
    %c0_i32 = arith.constant 0 : i32
    %c0_i32_0 = arith.constant 0 : i32
    %c0_i32_1 = arith.constant 0 : i32
    return %c0_i32, %arg0, %c0_i32_0 : i32, i32, i32
  }
  func.func @transform_2(%arg0: i32) -> (i32, i32) {
    %c0_i32 = arith.constant 0 : i32
    %c0_i32_0 = arith.constant 0 : i32
    %c0_i32_1 = arith.constant 0 : i32
    return %c0_i32, %c0_i32_0 : i32, i32
  }
  func.func @transform_3(%arg0: i32) -> (i32, i32) {
    %c0_i32 = arith.constant 0 : i32
    %c0_i32_0 = arith.constant 0 : i32
    %c0_i32_1 = arith.constant 0 : i32
    return %c0_i32, %c0_i32_0 : i32, i32
  }
  func.func @transform_4(%arg0: i32) -> (i32, i32) {
    %c0_i32 = arith.constant 0 : i32
    %c0_i32_0 = arith.constant 0 : i32
    %c0_i32_1 = arith.constant 0 : i32
    return %c0_i32, %c0_i32_0 : i32, i32
  }
  func.func @transform_5(%arg0: i32) -> (i32, i32) {
    %c0_i32 = arith.constant 0 : i32
    %c0_i32_0 = arith.constant 0 : i32
    %c0_i32_1 = arith.constant 0 : i32
    return %c0_i32, %c0_i32_0 : i32, i32
  }
  func.func @transform_6(%arg0: i32) -> (i32, i32) {
    %c0_i32 = arith.constant 0 : i32
    %c0_i32_0 = arith.constant 0 : i32
    %c0_i32_1 = arith.constant 0 : i32
    return %c0_i32, %c0_i32_0 : i32, i32
  }
  func.func @transform_7(%arg0: i32) -> (i32, i32) {
    %c0_i32 = arith.constant 0 : i32
    %c0_i32_0 = arith.constant 0 : i32
    %c0_i32_1 = arith.constant 0 : i32
    return %c0_i32, %c0_i32_0 : i32, i32
  }
  func.func @transform_8(%arg0: i32) -> (i32, i32) {
    %c0_i32 = arith.constant 0 : i32
    %c0_i32_0 = arith.constant 0 : i32
    %c0_i32_1 = arith.constant 0 : i32
    return %c0_i32, %c0_i32_0 : i32, i32
  }
  func.func @transform_9(%arg0: i32) -> (i32, i32) {
    %c0_i32 = arith.constant 0 : i32
    %c0_i32_0 = arith.constant 0 : i32
    %c0_i32_1 = arith.constant 0 : i32
    return %c0_i32, %c0_i32_0 : i32, i32
  }
  func.func @transform_10(%arg0: i32) -> (i32, i32) {
    %c0_i32 = arith.constant 0 : i32
    %c0_i32_0 = arith.constant 0 : i32
    return %arg0, %c0_i32 : i32, i32
  }
}

</mosaic_0001>

<llo_original>
// kernel: tpu_custom_call.1
$region0: #{tpu_custom_call.1}
  #allocation0 [shape = 'u32[]', space=smem, size = 0x4, offset = 0x4, fixed_abs, tag = 'smem constant byte address 0x4 - core index']
  #allocation1 [shape = 'u32[144,128]{1,0:T(1,128)}', space=vmem, size = 0x12000, scoped, tag = 'internal scratch']
  %s0 = inlined_call_operand.vmem [shape: bf16[8,784], index: 0, kind: input, shape index: {}]
  %s1 = inlined_call_operand.vmem [shape: bf16[3,8,106], index: 1, kind: input, shape index: {}]
  %s2 = inlined_call_operand.vmem [shape: bf16[784,32], index: 2, kind: input, shape index: {}]
  %s3 = inlined_call_operand.vmem [shape: bf16[784,32], index: 3, kind: input, shape index: {}]
  %s4 = inlined_call_operand.vmem [shape: bf16[64,64], index: 4, kind: input, shape index: {}]
  %s5 = inlined_call_operand.vmem [shape: f32[1,64], index: 5, kind: input, shape index: {}]
  %s6 = inlined_call_operand.vmem [shape: bf16[64,64], index: 6, kind: input, shape index: {}]
  %s7 = inlined_call_operand.vmem [shape: f32[1,64], index: 7, kind: input, shape index: {}]
  %s8 = inlined_call_operand.vmem [shape: bf16[64,20], index: 8, kind: input, shape index: {}]
  %s9 = inlined_call_operand.vmem [shape: f32[1,20], index: 9, kind: input, shape index: {}]
  %s10 = inlined_call_operand.hbm [shape: f32[8,30], index: 10, kind: output, shape index: {}]
  %s11 = sld [smem:[#allocation0]]
  $region50: #{tpu_custom_call.1} parent=0
    _
  %s13 = ssub.s32 1, %s11
  %s14 = scalar_select 0, %s13, %s11
  $region1: #{tpu_custom_call.1} parent=0
    #allocation2 [shape = 'u8[4096]{0}', space=vmem, size = 0x1000, scoped, tag = 'output window, operand 0, single buffered']
    #allocation3 [shape = 's32[1]{0}', space=sflag, size = 0x4, scoped, tag = 'scoped memory for tpu_custom_call.1']
    %15 = vsyncpa [#allocation3], 0
    // Predicated region
    $region2: #{tpu_custom_call.1} parent=1 // pred_check
      _
    $region3: #{tpu_custom_call.1} parent=1 // pred_check_branch
      %17 = sbr.rel (0) target = $region5
    $region4: #{tpu_custom_call.1} parent=1 // pred_region
      _
    $region5: #{tpu_custom_call.1} parent=1 // pred_fallthru
      _
    // Predicated region
    $region6: #{tpu_custom_call.1} parent=1 // pred_check
      _
    $region7: #{tpu_custom_call.1} parent=1 // pred_check_branch
      %19 = sbr.rel (0) target = $region9
    $region8: #{tpu_custom_call.1} parent=1 // pred_region
      _
    $region9: #{tpu_custom_call.1} parent=1 // pred_fallthru
      _
    // Predicated region
    $region10: #{tpu_custom_call.1} parent=1 // pred_check
      _
    $region11: #{tpu_custom_call.1} parent=1 // pred_check_branch
      %21 = sbr.rel (0) target = $region13
    $region12: #{tpu_custom_call.1} parent=1 // pred_region
      _
    $region13: #{tpu_custom_call.1} parent=1 // pred_fallthru
      _
    // Predicated region
    $region14: #{tpu_custom_call.1} parent=1 // pred_check
      _
    $region15: #{tpu_custom_call.1} parent=1 // pred_check_branch
      %23 = sbr.rel (0) target = $region17
    $region16: #{tpu_custom_call.1} parent=1 // pred_region
      _
    $region17: #{tpu_custom_call.1} parent=1 // pred_fallthru
      _
    // Predicated region
    $region18: #{tpu_custom_call.1} parent=1 // pred_check
      _
    $region19: #{tpu_custom_call.1} parent=1 // pred_check_branch
      %25 = sbr.rel (0) target = $region21
    $region20: #{tpu_custom_call.1} parent=1 // pred_region
      _
    $region21: #{tpu_custom_call.1} parent=1 // pred_fallthru
      _
    // Predicated region
    $region22: #{tpu_custom_call.1} parent=1 // pred_check
      _
    $region23: #{tpu_custom_call.1} parent=1 // pred_check_branch
      %27 = sbr.rel (0) target = $region25
    $region24: #{tpu_custom_call.1} parent=1 // pred_region
      _
    $region25: #{tpu_custom_call.1} parent=1 // pred_fallthru
      _
    // Predicated region
    $region26: #{tpu_custom_call.1} parent=1 // pred_check
      _
    $region27: #{tpu_custom_call.1} parent=1 // pred_check_branch
      %29 = sbr.rel (0) target = $region29
    $region28: #{tpu_custom_call.1} parent=1 // pred_region
      _
    $region29: #{tpu_custom_call.1} parent=1 // pred_fallthru
      _
    // Predicated region
    $region30: #{tpu_custom_call.1} parent=1 // pred_check
      _
    $region31: #{tpu_custom_call.1} parent=1 // pred_check_branch
      %31 = sbr.rel (0) target = $region33
    $region32: #{tpu_custom_call.1} parent=1 // pred_region
      _
    $region33: #{tpu_custom_call.1} parent=1 // pred_fallthru
      _
    // Predicated region
    $region34: #{tpu_custom_call.1} parent=1 // pred_check
      _
    $region35: #{tpu_custom_call.1} parent=1 // pred_check_branch
      %33 = sbr.rel (0) target = $region37
    $region36: #{tpu_custom_call.1} parent=1 // pred_region
      _
    $region37: #{tpu_custom_call.1} parent=1 // pred_fallthru
      _
    // Predicated region
    $region38: #{tpu_custom_call.1} parent=1 // pred_check
      _
    $region39: #{tpu_custom_call.1} parent=1 // pred_check_branch
      %35 = sbr.rel (0) target = $region41
    $region40: #{tpu_custom_call.1} parent=1 // pred_region
      _
    $region41: #{tpu_custom_call.1} parent=1 // pred_fallthru
      _
    %v37 = vld [vmem:[%s0] sm:$0xff]
    %v38 = vld [vmem:[%s0 + $0x8] sm:$0xff]
    %v39 = vld [vmem:[%s0 + $0x10] sm:$0xff]
    %v40 = vld [vmem:[%s0 + $0x18] sm:$0xf]
    %v41 = vld [vmem:[%s2] sm:$0xf]
    %v42 = vld [vmem:[%s2 + $0x4] sm:$0xf]
    %v43 = vld [vmem:[%s2 + $0x8] sm:$0xf]
    %v44 = vld [vmem:[%s2 + $0xc] sm:$0xf]
    %v45 = vld [vmem:[%s2 + $0x10] sm:$0xf]
    %v46 = vld [vmem:[%s2 + $0x14] sm:$0xf]
    %v47 = vld [vmem:[%s2 + $0x18] sm:$0xf]
    %v48 = vld [vmem:[%s2 + $0x1c] sm:$0xf]
    %v49 = vld [vmem:[%s2 + $0x20] sm:$0xf]
    %v50 = vld [vmem:[%s2 + $0x24] sm:$0xf]
    %v51 = vld [vmem:[%s2 + $0x28] sm:$0xf]
    %v52 = vld [vmem:[%s2 + $0x2c] sm:$0xf]
    %v53 = vld [vmem:[%s2 + $0x30] sm:$0xf]
    %v54 = vld [vmem:[%s2 + $0x34] sm:$0xf]
    %v55 = vld [vmem:[%s2 + $0x38] sm:$0xf]
    %v56 = vld [vmem:[%s2 + $0x3c] sm:$0xf]
    %v57 = vld [vmem:[%s2 + $0x40] sm:$0xf]
    %v58 = vld [vmem:[%s2 + $0x44] sm:$0xf]
    %v59 = vld [vmem:[%s2 + $0x48] sm:$0xf]
    %v60 = vld [vmem:[%s2 + $0x4c] sm:$0xf]
    %v61 = vld [vmem:[%s2 + $0x50] sm:$0xf]
    %v62 = vld [vmem:[%s2 + $0x54] sm:$0xf]
    %v63 = vld [vmem:[%s2 + $0x58] sm:$0xf]
    %v64 = vld [vmem:[%s2 + $0x5c] sm:$0xf]
    %v65 = vld [vmem:[%s2 + $0x60] sm:$0xf]
    %v66 = vld [vmem:[%s2 + $0x64] sm:$0xf]
    %v67 = vld [vmem:[%s2 + $0x68] sm:$0xf]
    %v68 = vld [vmem:[%s2 + $0x6c] sm:$0xf]
    %v69 = vld [vmem:[%s2 + $0x70] sm:$0xf]
    %v70 = vld [vmem:[%s2 + $0x74] sm:$0xf]
    %v71 = vld [vmem:[%s2 + $0x78] sm:$0xf]
    %v72 = vld [vmem:[%s2 + $0x7c] sm:$0xf]
    %v73 = vld [vmem:[%s2 + $0x80] sm:$0xf]
    %v74 = vld [vmem:[%s2 + $0x84] sm:$0xf]
    %v75 = vld [vmem:[%s2 + $0x88] sm:$0xf]
    %v76 = vld [vmem:[%s2 + $0x8c] sm:$0xf]
    %v77 = vld [vmem:[%s2 + $0x90] sm:$0xf]
    %v78 = vld [vmem:[%s2 + $0x94] sm:$0xf]
    %v79 = vld [vmem:[%s2 + $0x98] sm:$0xf]
    %v80 = vld [vmem:[%s2 + $0x9c] sm:$0xf]
    %v81 = vld [vmem:[%s2 + $0xa0] sm:$0xf]
    %v82 = vld [vmem:[%s2 + $0xa4] sm:$0xf]
    %v83 = vld [vmem:[%s2 + $0xa8] sm:$0xf]
    %v84 = vld [vmem:[%s2 + $0xac] sm:$0xf]
    %v85 = vld [vmem:[%s2 + $0xb0] sm:$0xf]
    %v86 = vld [vmem:[%s2 + $0xb4] sm:$0xf]
    %v87 = vld [vmem:[%s2 + $0xb8] sm:$0xf]
    %v88 = vld [vmem:[%s2 + $0xbc] sm:$0xf]
    %v89 = vld [vmem:[%s2 + $0xc0] sm:$0xf]
    %v90 = vld [vmem:[%s2 + $0xc4] sm:$0xf]
    %v91 = vld [vmem:[%s2 + $0xc8] sm:$0xf]
    %v92 = vld [vmem:[%s2 + $0xcc] sm:$0xf]
    %v93 = vld [vmem:[%s2 + $0xd0] sm:$0xf]
    %v94 = vld [vmem:[%s2 + $0xd4] sm:$0xf]
    %v95 = vld [vmem:[%s2 + $0xd8] sm:$0xf]
    %v96 = vld [vmem:[%s2 + $0xdc] sm:$0xf]
    %v97 = vld [vmem:[%s2 + $0xe0] sm:$0xf]
    %v98 = vld [vmem:[%s2 + $0xe4] sm:$0xf]
    %v99 = vld [vmem:[%s2 + $0xe8] sm:$0xf]
    %v100 = vld [vmem:[%s2 + $0xec] sm:$0xf]
    %v101 = vld [vmem:[%s2 + $0xf0] sm:$0xf]
    %v102 = vld [vmem:[%s2 + $0xf4] sm:$0xf]
    %v103 = vld [vmem:[%s2 + $0xf8] sm:$0xf]
    %v104 = vld [vmem:[%s2 + $0xfc] sm:$0xf]
    %v105 = vld [vmem:[%s2 + $0x100] sm:$0xf]
    %v106 = vld [vmem:[%s2 + $0x104] sm:$0xf]
    %v107 = vld [vmem:[%s2 + $0x108] sm:$0xf]
    %v108 = vld [vmem:[%s2 + $0x10c] sm:$0xf]
    %v109 = vld [vmem:[%s2 + $0x110] sm:$0xf]
    %v110 = vld [vmem:[%s2 + $0x114] sm:$0xf]
    %v111 = vld [vmem:[%s2 + $0x118] sm:$0xf]
    %v112 = vld [vmem:[%s2 + $0x11c] sm:$0xf]
    %v113 = vld [vmem:[%s2 + $0x120] sm:$0xf]
    %v114 = vld [vmem:[%s2 + $0x124] sm:$0xf]
    %v115 = vld [vmem:[%s2 + $0x128] sm:$0xf]
    %v116 = vld [vmem:[%s2 + $0x12c] sm:$0xf]
    %v117 = vld [vmem:[%s2 + $0x130] sm:$0xf]
    %v118 = vld [vmem:[%s2 + $0x134] sm:$0xf]
    %v119 = vld [vmem:[%s2 + $0x138] sm:$0xf]
    %v120 = vld [vmem:[%s2 + $0x13c] sm:$0xf]
    %v121 = vld [vmem:[%s2 + $0x140] sm:$0xf]
    %v122 = vld [vmem:[%s2 + $0x144] sm:$0xf]
    %v123 = vld [vmem:[%s2 + $0x148] sm:$0xf]
    %v124 = vld [vmem:[%s2 + $0x14c] sm:$0xf]
    %v125 = vld [vmem:[%s2 + $0x150] sm:$0xf]
    %v126 = vld [vmem:[%s2 + $0x154] sm:$0xf]
    %v127 = vld [vmem:[%s2 + $0x158] sm:$0xf]
    %v128 = vld [vmem:[%s2 + $0x15c] sm:$0xf]
    %v129 = vld [vmem:[%s2 + $0x160] sm:$0xf]
    %v130 = vld [vmem:[%s2 + $0x164] sm:$0xf]
    %v131 = vld [vmem:[%s2 + $0x168] sm:$0xf]
    %v132 = vld [vmem:[%s2 + $0x16c] sm:$0xf]
    %v133 = vld [vmem:[%s2 + $0x170] sm:$0xf]
    %v134 = vld [vmem:[%s2 + $0x174] sm:$0xf]
    %v135 = vld [vmem:[%s2 + $0x178] sm:$0xf]
    %v136 = vld [vmem:[%s2 + $0x17c] sm:$0xf]
    %v137 = vld [vmem:[%s2 + $0x180] sm:$0xf]
    %v138 = vld [vmem:[%s2 + $0x184] sm:$0xf]
    %v143 = vunpack.c.l.b16 %v37
    %v144 = vunpack.c.h.b16 %v37
    %v145 = vunpack.c.l.b16 %v38
    %v146 = vunpack.c.h.b16 %v38
    %v147 = vunpack.c.l.b16 %v39
    %v148 = vunpack.c.h.b16 %v39
    %v149 = vunpack.c.l.b16 %v40
    %v150 = vpack.c.b16 %v143, %v143
    %v151 = vpack.c.b16 %v144, %v144
    %v152 = vpack.c.b16 %v145, %v145
    %v153 = vpack.c.b16 %v146, %v146
    %v154 = vpack.c.b16 %v147, %v147
    %v155 = vpack.c.b16 %v148, %v148
    %v156 = vpack.c.b16 %v149, %v149
    %v261 = vunpack.c.l.b16 %v41
    %v262 = vunpack.c.l.b16 %v42
    %v263 = vunpack.c.l.b16 %v43
    %v264 = vunpack.c.l.b16 %v44
    %v265 = vunpack.c.l.b16 %v45
    %v266 = vunpack.c.l.b16 %v46
    %v267 = vunpack.c.l.b16 %v47
    %v268 = vunpack.c.l.b16 %v48
    %v269 = vunpack.c.l.b16 %v49
    %v270 = vunpack.c.l.b16 %v50
    %v271 = vunpack.c.l.b16 %v51
    %v272 = vunpack.c.l.b16 %v52
    %v273 = vunpack.c.l.b16 %v53
    %v274 = vunpack.c.l.b16 %v54
    %v275 = vunpack.c.l.b16 %v55
    %v276 = vunpack.c.l.b16 %v56
    %v277 = vunpack.c.l.b16 %v57
    %v278 = vunpack.c.l.b16 %v58
    %v279 = vunpack.c.l.b16 %v59
    %v280 = vunpack.c.l.b16 %v60
    %v281 = vunpack.c.l.b16 %v61
    %v282 = vunpack.c.l.b16 %v62
    %v283 = vunpack.c.l.b16 %v63
    %v284 = vunpack.c.l.b16 %v64
    %v285 = vunpack.c.l.b16 %v65
    %v286 = vunpack.c.l.b16 %v66
    %v287 = vunpack.c.l.b16 %v67
    %v288 = vunpack.c.l.b16 %v68
    %v289 = vunpack.c.l.b16 %v69
    %v290 = vunpack.c.l.b16 %v70
    %v291 = vunpack.c.l.b16 %v71
    %v292 = vunpack.c.l.b16 %v72
    %v293 = vunpack.c.l.b16 %v73
    %v294 = vunpack.c.l.b16 %v74
    %v295 = vunpack.c.l.b16 %v75
    %v296 = vunpack.c.l.b16 %v76
    %v297 = vunpack.c.l.b16 %v77
    %v298 = vunpack.c.l.b16 %v78
    %v299 = vunpack.c.l.b16 %v79
    %v300 = vunpack.c.l.b16 %v80
    %v301 = vunpack.c.l.b16 %v81
    %v302 = vunpack.c.l.b16 %v82
    %v303 = vunpack.c.l.b16 %v83
    %v304 = vunpack.c.l.b16 %v84
    %v305 = vunpack.c.l.b16 %v85
    %v306 = vunpack.c.l.b16 %v86
    %v307 = vunpack.c.l.b16 %v87
    %v308 = vunpack.c.l.b16 %v88
    %v309 = vunpack.c.l.b16 %v89
    %v310 = vunpack.c.l.b16 %v90
    %v311 = vunpack.c.l.b16 %v91
    %v312 = vunpack.c.l.b16 %v92
    %v313 = vunpack.c.l.b16 %v93
    %v314 = vunpack.c.l.b16 %v94
    %v315 = vunpack.c.l.b16 %v95
    %v316 = vunpack.c.l.b16 %v96
    %v317 = vunpack.c.l.b16 %v97
    %v318 = vunpack.c.l.b16 %v98
    %v319 = vunpack.c.l.b16 %v99
    %v320 = vunpack.c.l.b16 %v100
    %v321 = vunpack.c.l.b16 %v101
    %v322 = vunpack.c.l.b16 %v102
    %v323 = vunpack.c.l.b16 %v103
    %v324 = vunpack.c.l.b16 %v104
    %v325 = vunpack.c.l.b16 %v105
    %v326 = vunpack.c.l.b16 %v106
    %v327 = vunpack.c.l.b16 %v107
    %v328 = vunpack.c.l.b16 %v108
    %v329 = vunpack.c.l.b16 %v109
    %v330 = vunpack.c.l.b16 %v110
    %v331 = vunpack.c.l.b16 %v111
    %v332 = vunpack.c.l.b16 %v112
    %v333 = vunpack.c.l.b16 %v113
    %v334 = vunpack.c.l.b16 %v114
    %v335 = vunpack.c.l.b16 %v115
    %v336 = vunpack.c.l.b16 %v116
    %v337 = vunpack.c.l.b16 %v117
    %v338 = vunpack.c.l.b16 %v118
    %v339 = vunpack.c.l.b16 %v119
    %v340 = vunpack.c.l.b16 %v120
    %v341 = vunpack.c.l.b16 %v121
    %v342 = vunpack.c.l.b16 %v122
    %v343 = vunpack.c.l.b16 %v123
    %v344 = vunpack.c.l.b16 %v124
    %v345 = vunpack.c.l.b16 %v125
    %v346 = vunpack.c.l.b16 %v126
    %v347 = vunpack.c.l.b16 %v127
    %v348 = vunpack.c.l.b16 %v128
    %v349 = vunpack.c.l.b16 %v129
    %v350 = vunpack.c.l.b16 %v130
    %v351 = vunpack.c.l.b16 %v131
    %v352 = vunpack.c.l.b16 %v132
    %v353 = vunpack.c.l.b16 %v133
    %v354 = vunpack.c.l.b16 %v134
    %v355 = vunpack.c.l.b16 %v135
    %v356 = vunpack.c.l.b16 %v136
    %v357 = vunpack.c.l.b16 %v137
    %v358 = vunpack.c.l.b16 %v138
    %v359 = vpack.c.b16 %v262, %v261
    %v360 = vpack.c.b16 %v264, %v263
    %v361 = vpack.c.b16 %v266, %v265
    %v362 = vpack.c.b16 %v268, %v267
    %v363 = vpack.c.b16 %v270, %v269
    %v364 = vpack.c.b16 %v272, %v271
    %v365 = vpack.c.b16 %v274, %v273
    %v366 = vpack.c.b16 %v276, %v275
    %v367 = vpack.c.b16 %v278, %v277
    %v368 = vpack.c.b16 %v280, %v279
    %v369 = vpack.c.b16 %v282, %v281
    %v370 = vpack.c.b16 %v284, %v283
    %v371 = vpack.c.b16 %v286, %v285
    %v372 = vpack.c.b16 %v288, %v287
    %v373 = vpack.c.b16 %v290, %v289
    %v374 = vpack.c.b16 %v292, %v291
    %v375 = vpack.c.b16 %v294, %v293
    %v376 = vpack.c.b16 %v296, %v295
    %v377 = vpack.c.b16 %v298, %v297
    %v378 = vpack.c.b16 %v300, %v299
    %v379 = vpack.c.b16 %v302, %v301
    %v380 = vpack.c.b16 %v304, %v303
    %v381 = vpack.c.b16 %v306, %v305
    %v382 = vpack.c.b16 %v308, %v307
    %v383 = vpack.c.b16 %v310, %v309
    %v384 = vpack.c.b16 %v312, %v311
    %v385 = vpack.c.b16 %v314, %v313
    %v386 = vpack.c.b16 %v316, %v315
    %v387 = vpack.c.b16 %v318, %v317
    %v388 = vpack.c.b16 %v320, %v319
    %v389 = vpack.c.b16 %v322, %v321
    %v390 = vpack.c.b16 %v324, %v323
    %v391 = vpack.c.b16 %v326, %v325
    %v392 = vpack.c.b16 %v328, %v327
    %v393 = vpack.c.b16 %v330, %v329
    %v394 = vpack.c.b16 %v332, %v331
    %v395 = vpack.c.b16 %v334, %v333
    %v396 = vpack.c.b16 %v336, %v335
    %v397 = vpack.c.b16 %v338, %v337
    %v398 = vpack.c.b16 %v340, %v339
    %v399 = vpack.c.b16 %v342, %v341
    %v400 = vpack.c.b16 %v344, %v343
    %v401 = vpack.c.b16 %v346, %v345
    %v402 = vpack.c.b16 %v348, %v347
    %v403 = vpack.c.b16 %v350, %v349
    %v404 = vpack.c.b16 %v352, %v351
    %v405 = vpack.c.b16 %v354, %v353
    %v406 = vpack.c.b16 %v356, %v355
    %v407 = vpack.c.b16 %v358, %v357
    %vm457 = vcmask 130048
    %v459 = vsel %vm457, %v156, 0
    %461 = vmatprep.subr.bf16.mxu0 0
    %462 = vmatpush1.bf16.msra.mxu0 %v366
    %463 = vmatprep.subr.bf16.mxu0 0
    %464 = vmatpush1.bf16.msra.mxu0 %v365
    %465 = vmatprep.subr.bf16.mxu0 0
    %466 = vmatpush1.bf16.msra.mxu0 %v364
    %467 = vmatprep.subr.bf16.mxu0 0
    %468 = vmatpush1.bf16.msra.mxu0 %v363
    %469 = vmatprep.subr.bf16.mxu0 0
    %470 = vmatpush1.bf16.msra.mxu0 %v362
    %471 = vmatprep.subr.bf16.mxu0 0
    %472 = vmatpush1.bf16.msra.mxu0 %v361
    %473 = vmatprep.subr.bf16.mxu0 0
    %474 = vmatpush1.bf16.msra.mxu0 %v360
    %475 = vmatprep.subr.bf16.mxu0 0
    %476 = vmatpush1.bf16.msra.mxu0 %v359
    %477 = vmatprep.subr.bf16.mxu0 0
    %478 = vmatpush2.bf16.msra.mxu0 %v374
    %479 = vmatprep.subr.bf16.mxu0 0
    %480 = vmatpush2.bf16.msra.mxu0 %v373
    %481 = vmatprep.subr.bf16.mxu0 0
    %482 = vmatpush2.bf16.msra.mxu0 %v372
    %483 = vmatprep.subr.bf16.mxu0 0
    %484 = vmatpush2.bf16.msra.mxu0 %v371
    %485 = vmatprep.subr.bf16.mxu0 0
    %486 = vmatpush2.bf16.msra.mxu0 %v370
    %487 = vmatprep.subr.bf16.mxu0 0
    %488 = vmatpush2.bf16.msra.mxu0 %v369
    %489 = vmatprep.subr.bf16.mxu0 0
    %490 = vmatpush2.bf16.msra.mxu0 %v368
    %491 = vmatprep.subr.bf16.mxu0 0
    %492 = vmatpush2.bf16.msra.mxu0 %v367
    %493 = vmatprep.mubr.bf16.mxu0 %v151
    %494 = vmatmul.mubr.bf16.gmra.mxu0 %v150
    %v495 = vpop.f32.mrf.mxu0
    %v496 = vadd.f32 0.0, %v495
    %v497 = vpop.f32.mrf.mxu0
    %v498 = vpop.f32.mrf.mxu0
    %v499 = vpop.f32.mrf.mxu0
    %500 = vdwg.mxu0
    %501 = vmatprep.subr.bf16.mxu0 0
    %502 = vmatpush1.bf16.msra.mxu0 %v382
    %503 = vmatprep.subr.bf16.mxu0 0
    %504 = vmatpush1.bf16.msra.mxu0 %v381
    %505 = vmatprep.subr.bf16.mxu0 0
    %506 = vmatpush1.bf16.msra.mxu0 %v380
    %507 = vmatprep.subr.bf16.mxu0 0
    %508 = vmatpush1.bf16.msra.mxu0 %v379
    %509 = vmatprep.subr.bf16.mxu0 0
    %510 = vmatpush1.bf16.msra.mxu0 %v378
    %511 = vmatprep.subr.bf16.mxu0 0
    %512 = vmatpush1.bf16.msra.mxu0 %v377
    %513 = vmatprep.subr.bf16.mxu0 0
    %514 = vmatpush1.bf16.msra.mxu0 %v376
    %515 = vmatprep.subr.bf16.mxu0 0
    %516 = vmatpush1.bf16.msra.mxu0 %v375
    %517 = vmatprep.subr.bf16.mxu0 0
    %518 = vmatpush2.bf16.msra.mxu0 %v390
    %519 = vmatprep.subr.bf16.mxu0 0
    %520 = vmatpush2.bf16.msra.mxu0 %v389
    %521 = vmatprep.subr.bf16.mxu0 0
    %522 = vmatpush2.bf16.msra.mxu0 %v388
    %523 = vmatprep.subr.bf16.mxu0 0
    %524 = vmatpush2.bf16.msra.mxu0 %v387
    %525 = vmatprep.subr.bf16.mxu0 0
    %526 = vmatpush2.bf16.msra.mxu0 %v386
    %527 = vmatprep.subr.bf16.mxu0 0
    %528 = vmatpush2.bf16.msra.mxu0 %v385
    %529 = vmatprep.subr.bf16.mxu0 0
    %530 = vmatpush2.bf16.msra.mxu0 %v384
    %531 = vmatprep.subr.bf16.mxu0 0
    %532 = vmatpush2.bf16.msra.mxu0 %v383
    %533 = vmatprep.mubr.bf16.mxu0 %v153
    %534 = vmatmul.mubr.bf16.gmra.mxu0 %v152
    %v535 = vpop.f32.mrf.mxu0
    %v536 = vadd.f32 %v496, %v535
    %v537 = vpop.f32.mrf.mxu0
    %v538 = vpop.f32.mrf.mxu0
    %v539 = vpop.f32.mrf.mxu0
    %540 = vdwg.mxu0
    %541 = vmatprep.subr.bf16.mxu0 0
    %542 = vmatpush1.bf16.msra.mxu0 %v398
    %543 = vmatprep.subr.bf16.mxu0 0
    %544 = vmatpush1.bf16.msra.mxu0 %v397
    %545 = vmatprep.subr.bf16.mxu0 0
    %546 = vmatpush1.bf16.msra.mxu0 %v396
    %547 = vmatprep.subr.bf16.mxu0 0
    %548 = vmatpush1.bf16.msra.mxu0 %v395
    %549 = vmatprep.subr.bf16.mxu0 0
    %550 = vmatpush1.bf16.msra.mxu0 %v394
    %551 = vmatprep.subr.bf16.mxu0 0
    %552 = vmatpush1.bf16.msra.mxu0 %v393
    %553 = vmatprep.subr.bf16.mxu0 0
    %554 = vmatpush1.bf16.msra.mxu0 %v392
    %555 = vmatprep.subr.bf16.mxu0 0
    %556 = vmatpush1.bf16.msra.mxu0 %v391
    %557 = vmatprep.subr.bf16.mxu0 0
    %558 = vmatpush2.bf16.msra.mxu0 %v406
    %559 = vmatprep.subr.bf16.mxu0 0
    %560 = vmatpush2.bf16.msra.mxu0 %v405
    %561 = vmatprep.subr.bf16.mxu0 0
    %562 = vmatpush2.bf16.msra.mxu0 %v404
    %563 = vmatprep.subr.bf16.mxu0 0
    %564 = vmatpush2.bf16.msra.mxu0 %v403
    %565 = vmatprep.subr.bf16.mxu0 0
    %566 = vmatpush2.bf16.msra.mxu0 %v402
    %567 = vmatprep.subr.bf16.mxu0 0
    %568 = vmatpush2.bf16.msra.mxu0 %v401
    %569 = vmatprep.subr.bf16.mxu0 0
    %570 = vmatpush2.bf16.msra.mxu0 %v400
    %571 = vmatprep.subr.bf16.mxu0 0
    %572 = vmatpush2.bf16.msra.mxu0 %v399
    %573 = vmatprep.mubr.bf16.mxu0 %v155
    %574 = vmatmul.mubr.bf16.gmra.mxu0 %v154
    %v575 = vpop.f32.mrf.mxu0
    %v576 = vadd.f32 %v536, %v575
    %v577 = vpop.f32.mrf.mxu0
    %v578 = vpop.f32.mrf.mxu0
    %v579 = vpop.f32.mrf.mxu0
    %580 = vdwg.mxu0
    %581 = vmatprep.subr.bf16.mxu0 0
    %582 = vmatpush1.bf16.msra.mxu0 0
    %583 = vmatprep.subr.bf16.mxu0 0
    %584 = vmatpush1.bf16.msra.mxu0 0
    %585 = vmatprep.subr.bf16.mxu0 0
    %586 = vmatpush1.bf16.msra.mxu0 0
    %587 = vmatprep.subr.bf16.mxu0 0
    %588 = vmatpush1.bf16.msra.mxu0 0
    %589 = vmatprep.subr.bf16.mxu0 0
    %590 = vmatpush1.bf16.msra.mxu0 0
    %591 = vmatprep.subr.bf16.mxu0 0
    %592 = vmatpush1.bf16.msra.mxu0 0
    %593 = vmatprep.subr.bf16.mxu0 0
    %594 = vmatpush1.bf16.msra.mxu0 0
    %595 = vmatprep.subr.bf16.mxu0 0
    %596 = vmatpush1.bf16.msra.mxu0 %v407
    %597 = vmatprep.subr.bf16.mxu0 0
    %598 = vmatpush2.bf16.msra.mxu0 0
    %599 = vmatprep.subr.bf16.mxu0 0
    %600 = vmatpush2.bf16.msra.mxu0 0
    %601 = vmatprep.subr.bf16.mxu0 0
    %602 = vmatpush2.bf16.msra.mxu0 0
    %603 = vmatprep.subr.bf16.mxu0 0
    %604 = vmatpush2.bf16.msra.mxu0 0
    %605 = vmatprep.subr.bf16.mxu0 0
    %606 = vmatpush2.bf16.msra.mxu0 0
    %607 = vmatprep.subr.bf16.mxu0 0
    %608 = vmatpush2.bf16.msra.mxu0 0
    %609 = vmatprep.subr.bf16.mxu0 0
    %610 = vmatpush2.bf16.msra.mxu0 0
    %611 = vmatprep.subr.bf16.mxu0 0
    %612 = vmatpush2.bf16.msra.mxu0 0
    %613 = vmatprep.mubr.bf16.mxu0 0
    %614 = vmatmul.mubr.bf16.gmra.mxu0 %v459
    %v615 = vpop.f32.mrf.mxu0
    %v616 = vadd.f32 %v576, %v615
    %v617 = vpop.f32.mrf.mxu0
    %v618 = vpop.f32.mrf.mxu0
    %v619 = vpop.f32.mrf.mxu0
    %620 = vdwg.mxu0
    %v621 = vmul.bf16 %v37, %v37
    %v622 = vmul.bf16 %v38, %v38
    %v623 = vmul.bf16 %v39, %v39
    %v624 = vmul.bf16 %v40, %v40
    %v625 = vld [vmem:[%s3] sm:$0xf]
    %v626 = vld [vmem:[%s3 + $0x4] sm:$0xf]
    %v627 = vld [vmem:[%s3 + $0x8] sm:$0xf]
    %v628 = vld [vmem:[%s3 + $0xc] sm:$0xf]
    %v629 = vld [vmem:[%s3 + $0x10] sm:$0xf]
    %v630 = vld [vmem:[%s3 + $0x14] sm:$0xf]
    %v631 = vld [vmem:[%s3 + $0x18] sm:$0xf]
    %v632 = vld [vmem:[%s3 + $0x1c] sm:$0xf]
    %v633 = vld [vmem:[%s3 + $0x20] sm:$0xf]
    %v634 = vld [vmem:[%s3 + $0x24] sm:$0xf]
    %v635 = vld [vmem:[%s3 + $0x28] sm:$0xf]
    %v636 = vld [vmem:[%s3 + $0x2c] sm:$0xf]
    %v637 = vld [vmem:[%s3 + $0x30] sm:$0xf]
    %v638 = vld [vmem:[%s3 + $0x34] sm:$0xf]
    %v639 = vld [vmem:[%s3 + $0x38] sm:$0xf]
    %v640 = vld [vmem:[%s3 + $0x3c] sm:$0xf]
    %v641 = vld [vmem:[%s3 + $0x40] sm:$0xf]
    %v642 = vld [vmem:[%s3 + $0x44] sm:$0xf]
    %v643 = vld [vmem:[%s3 + $0x48] sm:$0xf]
    %v644 = vld [vmem:[%s3 + $0x4c] sm:$0xf]
    %v645 = vld [vmem:[%s3 + $0x50] sm:$0xf]
    %v646 = vld [vmem:[%s3 + $0x54] sm:$0xf]
    %v647 = vld [vmem:[%s3 + $0x58] sm:$0xf]
    %v648 = vld [vmem:[%s3 + $0x5c] sm:$0xf]
    %v649 = vld [vmem:[%s3 + $0x60] sm:$0xf]
    %v650 = vld [vmem:[%s3 + $0x64] sm:$0xf]
    %v651 = vld [vmem:[%s3 + $0x68] sm:$0xf]
    %v652 = vld [vmem:[%s3 + $0x6c] sm:$0xf]
    %v653 = vld [vmem:[%s3 + $0x70] sm:$0xf]
    %v654 = vld [vmem:[%s3 + $0x74] sm:$0xf]
    %v655 = vld [vmem:[%s3 + $0x78] sm:$0xf]
    %v656 = vld [vmem:[%s3 + $0x7c] sm:$0xf]
    %v657 = vld [vmem:[%s3 + $0x80] sm:$0xf]
    %v658 = vld [vmem:[%s3 + $0x84] sm:$0xf]
    %v659 = vld [vmem:[%s3 + $0x88] sm:$0xf]
    %v660 = vld [vmem:[%s3 + $0x8c] sm:$0xf]
    %v661 = vld [vmem:[%s3 + $0x90] sm:$0xf]
    %v662 = vld [vmem:[%s3 + $0x94] sm:$0xf]
    %v663 = vld [vmem:[%s3 + $0x98] sm:$0xf]
    %v664 = vld [vmem:[%s3 + $0x9c] sm:$0xf]
    %v665 = vld [vmem:[%s3 + $0xa0] sm:$0xf]
    %v666 = vld [vmem:[%s3 + $0xa4] sm:$0xf]
    %v667 = vld [vmem:[%s3 + $0xa8] sm:$0xf]
    %v668 = vld [vmem:[%s3 + $0xac] sm:$0xf]
    %v669 = vld [vmem:[%s3 + $0xb0] sm:$0xf]
    %v670 = vld [vmem:[%s3 + $0xb4] sm:$0xf]
    %v671 = vld [vmem:[%s3 + $0xb8] sm:$0xf]
    %v672 = vld [vmem:[%s3 + $0xbc] sm:$0xf]
    %v673 = vld [vmem:[%s3 + $0xc0] sm:$0xf]
    %v674 = vld [vmem:[%s3 + $0xc4] sm:$0xf]
    %v675 = vld [vmem:[%s3 + $0xc8] sm:$0xf]
    %v676 = vld [vmem:[%s3 + $0xcc] sm:$0xf]
    %v677 = vld [vmem:[%s3 + $0xd0] sm:$0xf]
    %v678 = vld [vmem:[%s3 + $0xd4] sm:$0xf]
    %v679 = vld [vmem:[%s3 + $0xd8] sm:$0xf]
    %v680 = vld [vmem:[%s3 + $0xdc] sm:$0xf]
    %v681 = vld [vmem:[%s3 + $0xe0] sm:$0xf]
    %v682 = vld [vmem:[%s3 + $0xe4] sm:$0xf]
    %v683 = vld [vmem:[%s3 + $0xe8] sm:$0xf]
    %v684 = vld [vmem:[%s3 + $0xec] sm:$0xf]
    %v685 = vld [vmem:[%s3 + $0xf0] sm:$0xf]
    %v686 = vld [vmem:[%s3 + $0xf4] sm:$0xf]
    %v687 = vld [vmem:[%s3 + $0xf8] sm:$0xf]
    %v688 = vld [vmem:[%s3 + $0xfc] sm:$0xf]
    %v689 = vld [vmem:[%s3 + $0x100] sm:$0xf]
    %v690 = vld [vmem:[%s3 + $0x104] sm:$0xf]
    %v691 = vld [vmem:[%s3 + $0x108] sm:$0xf]
    %v692 = vld [vmem:[%s3 + $0x10c] sm:$0xf]
    %v693 = vld [vmem:[%s3 + $0x110] sm:$0xf]
    %v694 = vld [vmem:[%s3 + $0x114] sm:$0xf]
    %v695 = vld [vmem:[%s3 + $0x118] sm:$0xf]
    %v696 = vld [vmem:[%s3 + $0x11c] sm:$0xf]
    %v697 = vld [vmem:[%s3 + $0x120] sm:$0xf]
    %v698 = vld [vmem:[%s3 + $0x124] sm:$0xf]
    %v699 = vld [vmem:[%s3 + $0x128] sm:$0xf]
    %v700 = vld [vmem:[%s3 + $0x12c] sm:$0xf]
    %v701 = vld [vmem:[%s3 + $0x130] sm:$0xf]
    %v702 = vld [vmem:[%s3 + $0x134] sm:$0xf]
    %v703 = vld [vmem:[%s3 + $0x138] sm:$0xf]
    %v704 = vld [vmem:[%s3 + $0x13c] sm:$0xf]
    %v705 = vld [vmem:[%s3 + $0x140] sm:$0xf]
    %v706 = vld [vmem:[%s3 + $0x144] sm:$0xf]
    %v707 = vld [vmem:[%s3 + $0x148] sm:$0xf]
    %v708 = vld [vmem:[%s3 + $0x14c] sm:$0xf]
    %v709 = vld [vmem:[%s3 + $0x150] sm:$0xf]
    %v710 = vld [vmem:[%s3 + $0x154] sm:$0xf]
    %v711 = vld [vmem:[%s3 + $0x158] sm:$0xf]
    %v712 = vld [vmem:[%s3 + $0x15c] sm:$0xf]
    %v713 = vld [vmem:[%s3 + $0x160] sm:$0xf]
    %v714 = vld [vmem:[%s3 + $0x164] sm:$0xf]
    %v715 = vld [vmem:[%s3 + $0x168] sm:$0xf]
    %v716 = vld [vmem:[%s3 + $0x16c] sm:$0xf]
    %v717 = vld [vmem:[%s3 + $0x170] sm:$0xf]
    %v718 = vld [vmem:[%s3 + $0x174] sm:$0xf]
    %v719 = vld [vmem:[%s3 + $0x178] sm:$0xf]
    %v720 = vld [vmem:[%s3 + $0x17c] sm:$0xf]
    %v721 = vld [vmem:[%s3 + $0x180] sm:$0xf]
    %v722 = vld [vmem:[%s3 + $0x184] sm:$0xf]
    %v727 = vunpack.c.l.b16 %v621
    %v728 = vunpack.c.h.b16 %v621
    %v729 = vunpack.c.l.b16 %v622
    %v730 = vunpack.c.h.b16 %v622
    %v731 = vunpack.c.l.b16 %v623
    %v732 = vunpack.c.h.b16 %v623
    %v733 = vunpack.c.l.b16 %v624
    %v734 = vpack.c.b16 %v727, %v727
    %v735 = vpack.c.b16 %v728, %v728
    %v736 = vpack.c.b16 %v729, %v729
    %v737 = vpack.c.b16 %v730, %v730
    %v738 = vpack.c.b16 %v731, %v731
    %v739 = vpack.c.b16 %v732, %v732
    %v740 = vpack.c.b16 %v733, %v733
    %v845 = vunpack.c.l.b16 %v625
    %v846 = vunpack.c.l.b16 %v626
    %v847 = vunpack.c.l.b16 %v627
    %v848 = vunpack.c.l.b16 %v628
    %v849 = vunpack.c.l.b16 %v629
    %v850 = vunpack.c.l.b16 %v630
    %v851 = vunpack.c.l.b16 %v631
    %v852 = vunpack.c.l.b16 %v632
    %v853 = vunpack.c.l.b16 %v633
    %v854 = vunpack.c.l.b16 %v634
    %v855 = vunpack.c.l.b16 %v635
    %v856 = vunpack.c.l.b16 %v636
    %v857 = vunpack.c.l.b16 %v637
    %v858 = vunpack.c.l.b16 %v638
    %v859 = vunpack.c.l.b16 %v639
    %v860 = vunpack.c.l.b16 %v640
    %v861 = vunpack.c.l.b16 %v641
    %v862 = vunpack.c.l.b16 %v642
    %v863 = vunpack.c.l.b16 %v643
    %v864 = vunpack.c.l.b16 %v644
    %v865 = vunpack.c.l.b16 %v645
    %v866 = vunpack.c.l.b16 %v646
    %v867 = vunpack.c.l.b16 %v647
    %v868 = vunpack.c.l.b16 %v648
    %v869 = vunpack.c.l.b16 %v649
    %v870 = vunpack.c.l.b16 %v650
    %v871 = vunpack.c.l.b16 %v651
    %v872 = vunpack.c.l.b16 %v652
    %v873 = vunpack.c.l.b16 %v653
    %v874 = vunpack.c.l.b16 %v654
    %v875 = vunpack.c.l.b16 %v655
    %v876 = vunpack.c.l.b16 %v656
    %v877 = vunpack.c.l.b16 %v657
    %v878 = vunpack.c.l.b16 %v658
    %v879 = vunpack.c.l.b16 %v659
    %v880 = vunpack.c.l.b16 %v660
    %v881 = vunpack.c.l.b16 %v661
    %v882 = vunpack.c.l.b16 %v662
    %v883 = vunpack.c.l.b16 %v663
    %v884 = vunpack.c.l.b16 %v664
    %v885 = vunpack.c.l.b16 %v665
    %v886 = vunpack.c.l.b16 %v666
    %v887 = vunpack.c.l.b16 %v667
    %v888 = vunpack.c.l.b16 %v668
    %v889 = vunpack.c.l.b16 %v669
    %v890 = vunpack.c.l.b16 %v670
    %v891 = vunpack.c.l.b16 %v671
    %v892 = vunpack.c.l.b16 %v672
    %v893 = vunpack.c.l.b16 %v673
    %v894 = vunpack.c.l.b16 %v674
    %v895 = vunpack.c.l.b16 %v675
    %v896 = vunpack.c.l.b16 %v676
    %v897 = vunpack.c.l.b16 %v677
    %v898 = vunpack.c.l.b16 %v678
    %v899 = vunpack.c.l.b16 %v679
    %v900 = vunpack.c.l.b16 %v680
    %v901 = vunpack.c.l.b16 %v681
    %v902 = vunpack.c.l.b16 %v682
    %v903 = vunpack.c.l.b16 %v683
    %v904 = vunpack.c.l.b16 %v684
    %v905 = vunpack.c.l.b16 %v685
    %v906 = vunpack.c.l.b16 %v686
    %v907 = vunpack.c.l.b16 %v687
    %v908 = vunpack.c.l.b16 %v688
    %v909 = vunpack.c.l.b16 %v689
    %v910 = vunpack.c.l.b16 %v690
    %v911 = vunpack.c.l.b16 %v691
    %v912 = vunpack.c.l.b16 %v692
    %v913 = vunpack.c.l.b16 %v693
    %v914 = vunpack.c.l.b16 %v694
    %v915 = vunpack.c.l.b16 %v695
    %v916 = vunpack.c.l.b16 %v696
    %v917 = vunpack.c.l.b16 %v697
    %v918 = vunpack.c.l.b16 %v698
    %v919 = vunpack.c.l.b16 %v699
    %v920 = vunpack.c.l.b16 %v700
    %v921 = vunpack.c.l.b16 %v701
    %v922 = vunpack.c.l.b16 %v702
    %v923 = vunpack.c.l.b16 %v703
    %v924 = vunpack.c.l.b16 %v704
    %v925 = vunpack.c.l.b16 %v705
    %v926 = vunpack.c.l.b16 %v706
    %v927 = vunpack.c.l.b16 %v707
    %v928 = vunpack.c.l.b16 %v708
    %v929 = vunpack.c.l.b16 %v709
    %v930 = vunpack.c.l.b16 %v710
    %v931 = vunpack.c.l.b16 %v711
    %v932 = vunpack.c.l.b16 %v712
    %v933 = vunpack.c.l.b16 %v713
    %v934 = vunpack.c.l.b16 %v714
    %v935 = vunpack.c.l.b16 %v715
    %v936 = vunpack.c.l.b16 %v716
    %v937 = vunpack.c.l.b16 %v717
    %v938 = vunpack.c.l.b16 %v718
    %v939 = vunpack.c.l.b16 %v719
    %v940 = vunpack.c.l.b16 %v720
    %v941 = vunpack.c.l.b16 %v721
    %v942 = vunpack.c.l.b16 %v722
    %v943 = vpack.c.b16 %v846, %v845
    %v944 = vpack.c.b16 %v848, %v847
    %v945 = vpack.c.b16 %v850, %v849
    %v946 = vpack.c.b16 %v852, %v851
    %v947 = vpack.c.b16 %v854, %v853
    %v948 = vpack.c.b16 %v856, %v855
    %v949 = vpack.c.b16 %v858, %v857
    %v950 = vpack.c.b16 %v860, %v859
    %v951 = vpack.c.b16 %v862, %v861
    %v952 = vpack.c.b16 %v864, %v863
    %v953 = vpack.c.b16 %v866, %v865
    %v954 = vpack.c.b16 %v868, %v867
    %v955 = vpack.c.b16 %v870, %v869
    %v956 = vpack.c.b16 %v872, %v871
    %v957 = vpack.c.b16 %v874, %v873
    %v958 = vpack.c.b16 %v876, %v875
    %v959 = vpack.c.b16 %v878, %v877
    %v960 = vpack.c.b16 %v880, %v879
    %v961 = vpack.c.b16 %v882, %v881
    %v962 = vpack.c.b16 %v884, %v883
    %v963 = vpack.c.b16 %v886, %v885
    %v964 = vpack.c.b16 %v888, %v887
    %v965 = vpack.c.b16 %v890, %v889
    %v966 = vpack.c.b16 %v892, %v891
    %v967 = vpack.c.b16 %v894, %v893
    %v968 = vpack.c.b16 %v896, %v895
    %v969 = vpack.c.b16 %v898, %v897
    %v970 = vpack.c.b16 %v900, %v899
    %v971 = vpack.c.b16 %v902, %v901
    %v972 = vpack.c.b16 %v904, %v903
    %v973 = vpack.c.b16 %v906, %v905
    %v974 = vpack.c.b16 %v908, %v907
    %v975 = vpack.c.b16 %v910, %v909
    %v976 = vpack.c.b16 %v912, %v911
    %v977 = vpack.c.b16 %v914, %v913
    %v978 = vpack.c.b16 %v916, %v915
    %v979 = vpack.c.b16 %v918, %v917
    %v980 = vpack.c.b16 %v920, %v919
    %v981 = vpack.c.b16 %v922, %v921
    %v982 = vpack.c.b16 %v924, %v923
    %v983 = vpack.c.b16 %v926, %v925
    %v984 = vpack.c.b16 %v928, %v927
    %v985 = vpack.c.b16 %v930, %v929
    %v986 = vpack.c.b16 %v932, %v931
    %v987 = vpack.c.b16 %v934, %v933
    %v988 = vpack.c.b16 %v936, %v935
    %v989 = vpack.c.b16 %v938, %v937
    %v990 = vpack.c.b16 %v940, %v939
    %v991 = vpack.c.b16 %v942, %v941
    %v1042 = vsel %vm457, %v740, 0
    %1044 = vmatprep.subr.bf16.mxu0 0
    %1045 = vmatpush1.bf16.msra.mxu0 %v950
    %1046 = vmatprep.subr.bf16.mxu0 0
    %1047 = vmatpush1.bf16.msra.mxu0 %v949
    %1048 = vmatprep.subr.bf16.mxu0 0
    %1049 = vmatpush1.bf16.msra.mxu0 %v948
    %1050 = vmatprep.subr.bf16.mxu0 0
    %1051 = vmatpush1.bf16.msra.mxu0 %v947
    %1052 = vmatprep.subr.bf16.mxu0 0
    %1053 = vmatpush1.bf16.msra.mxu0 %v946
    %1054 = vmatprep.subr.bf16.mxu0 0
    %1055 = vmatpush1.bf16.msra.mxu0 %v945
    %1056 = vmatprep.subr.bf16.mxu0 0
    %1057 = vmatpush1.bf16.msra.mxu0 %v944
    %1058 = vmatprep.subr.bf16.mxu0 0
    %1059 = vmatpush1.bf16.msra.mxu0 %v943
    %1060 = vmatprep.subr.bf16.mxu0 0
    %1061 = vmatpush2.bf16.msra.mxu0 %v958
    %1062 = vmatprep.subr.bf16.mxu0 0
    %1063 = vmatpush2.bf16.msra.mxu0 %v957
    %1064 = vmatprep.subr.bf16.mxu0 0
    %1065 = vmatpush2.bf16.msra.mxu0 %v956
    %1066 = vmatprep.subr.bf16.mxu0 0
    %1067 = vmatpush2.bf16.msra.mxu0 %v955
    %1068 = vmatprep.subr.bf16.mxu0 0
    %1069 = vmatpush2.bf16.msra.mxu0 %v954
    %1070 = vmatprep.subr.bf16.mxu0 0
    %1071 = vmatpush2.bf16.msra.mxu0 %v953
    %1072 = vmatprep.subr.bf16.mxu0 0
    %1073 = vmatpush2.bf16.msra.mxu0 %v952
    %1074 = vmatprep.subr.bf16.mxu0 0
    %1075 = vmatpush2.bf16.msra.mxu0 %v951
    %1076 = vmatprep.mubr.bf16.mxu0 %v735
    %1077 = vmatmul.mubr.bf16.gmra.mxu0 %v734
    %v1078 = vpop.f32.mrf.mxu0
    %v1079 = vadd.f32 0.0, %v1078
    %v1080 = vpop.f32.mrf.mxu0
    %v1081 = vpop.f32.mrf.mxu0
    %v1082 = vpop.f32.mrf.mxu0
    %1083 = vdwg.mxu0
    %1084 = vmatprep.subr.bf16.mxu0 0
    %1085 = vmatpush1.bf16.msra.mxu0 %v966
    %1086 = vmatprep.subr.bf16.mxu0 0
    %1087 = vmatpush1.bf16.msra.mxu0 %v965
    %1088 = vmatprep.subr.bf16.mxu0 0
    %1089 = vmatpush1.bf16.msra.mxu0 %v964
    %1090 = vmatprep.subr.bf16.mxu0 0
    %1091 = vmatpush1.bf16.msra.mxu0 %v963
    %1092 = vmatprep.subr.bf16.mxu0 0
    %1093 = vmatpush1.bf16.msra.mxu0 %v962
    %1094 = vmatprep.subr.bf16.mxu0 0
    %1095 = vmatpush1.bf16.msra.mxu0 %v961
    %1096 = vmatprep.subr.bf16.mxu0 0
    %1097 = vmatpush1.bf16.msra.mxu0 %v960
    %1098 = vmatprep.subr.bf16.mxu0 0
    %1099 = vmatpush1.bf16.msra.mxu0 %v959
    %1100 = vmatprep.subr.bf16.mxu0 0
    %1101 = vmatpush2.bf16.msra.mxu0 %v974
    %1102 = vmatprep.subr.bf16.mxu0 0
    %1103 = vmatpush2.bf16.msra.mxu0 %v973
    %1104 = vmatprep.subr.bf16.mxu0 0
    %1105 = vmatpush2.bf16.msra.mxu0 %v972
    %1106 = vmatprep.subr.bf16.mxu0 0
    %1107 = vmatpush2.bf16.msra.mxu0 %v971
    %1108 = vmatprep.subr.bf16.mxu0 0
    %1109 = vmatpush2.bf16.msra.mxu0 %v970
    %1110 = vmatprep.subr.bf16.mxu0 0
    %1111 = vmatpush2.bf16.msra.mxu0 %v969
    %1112 = vmatprep.subr.bf16.mxu0 0
    %1113 = vmatpush2.bf16.msra.mxu0 %v968
    %1114 = vmatprep.subr.bf16.mxu0 0
    %1115 = vmatpush2.bf16.msra.mxu0 %v967
    %1116 = vmatprep.mubr.bf16.mxu0 %v737
    %1117 = vmatmul.mubr.bf16.gmra.mxu0 %v736
    %v1118 = vpop.f32.mrf.mxu0
    %v1119 = vadd.f32 %v1079, %v1118
    %v1120 = vpop.f32.mrf.mxu0
    %v1121 = vpop.f32.mrf.mxu0
    %v1122 = vpop.f32.mrf.mxu0
    %1123 = vdwg.mxu0
    %1124 = vmatprep.subr.bf16.mxu0 0
    %1125 = vmatpush1.bf16.msra.mxu0 %v982
    %1126 = vmatprep.subr.bf16.mxu0 0
    %1127 = vmatpush1.bf16.msra.mxu0 %v981
    %1128 = vmatprep.subr.bf16.mxu0 0
    %1129 = vmatpush1.bf16.msra.mxu0 %v980
    %1130 = vmatprep.subr.bf16.mxu0 0
    %1131 = vmatpush1.bf16.msra.mxu0 %v979
    %1132 = vmatprep.subr.bf16.mxu0 0
    %1133 = vmatpush1.bf16.msra.mxu0 %v978
    %1134 = vmatprep.subr.bf16.mxu0 0
    %1135 = vmatpush1.bf16.msra.mxu0 %v977
    %1136 = vmatprep.subr.bf16.mxu0 0
    %1137 = vmatpush1.bf16.msra.mxu0 %v976
    %1138 = vmatprep.subr.bf16.mxu0 0
    %1139 = vmatpush1.bf16.msra.mxu0 %v975
    %1140 = vmatprep.subr.bf16.mxu0 0
    %1141 = vmatpush2.bf16.msra.mxu0 %v990
    %1142 = vmatprep.subr.bf16.mxu0 0
    %1143 = vmatpush2.bf16.msra.mxu0 %v989
    %1144 = vmatprep.subr.bf16.mxu0 0
    %1145 = vmatpush2.bf16.msra.mxu0 %v988
    %1146 = vmatprep.subr.bf16.mxu0 0
    %1147 = vmatpush2.bf16.msra.mxu0 %v987
    %1148 = vmatprep.subr.bf16.mxu0 0
    %1149 = vmatpush2.bf16.msra.mxu0 %v986
    %1150 = vmatprep.subr.bf16.mxu0 0
    %1151 = vmatpush2.bf16.msra.mxu0 %v985
    %1152 = vmatprep.subr.bf16.mxu0 0
    %1153 = vmatpush2.bf16.msra.mxu0 %v984
    %1154 = vmatprep.subr.bf16.mxu0 0
    %1155 = vmatpush2.bf16.msra.mxu0 %v983
    %1156 = vmatprep.mubr.bf16.mxu0 %v739
    %1157 = vmatmul.mubr.bf16.gmra.mxu0 %v738
    %v1158 = vpop.f32.mrf.mxu0
    %v1159 = vadd.f32 %v1119, %v1158
    %v1160 = vpop.f32.mrf.mxu0
    %v1161 = vpop.f32.mrf.mxu0
    %v1162 = vpop.f32.mrf.mxu0
    %1163 = vdwg.mxu0
    %1164 = vmatprep.subr.bf16.mxu0 0
    %1165 = vmatpush1.bf16.msra.mxu0 0
    %1166 = vmatprep.subr.bf16.mxu0 0
    %1167 = vmatpush1.bf16.msra.mxu0 0
    %1168 = vmatprep.subr.bf16.mxu0 0
    %1169 = vmatpush1.bf16.msra.mxu0 0
    %1170 = vmatprep.subr.bf16.mxu0 0
    %1171 = vmatpush1.bf16.msra.mxu0 0
    %1172 = vmatprep.subr.bf16.mxu0 0
    %1173 = vmatpush1.bf16.msra.mxu0 0
    %1174 = vmatprep.subr.bf16.mxu0 0
    %1175 = vmatpush1.bf16.msra.mxu0 0
    %1176 = vmatprep.subr.bf16.mxu0 0
    %1177 = vmatpush1.bf16.msra.mxu0 0
    %1178 = vmatprep.subr.bf16.mxu0 0
    %1179 = vmatpush1.bf16.msra.mxu0 %v991
    %1180 = vmatprep.subr.bf16.mxu0 0
    %1181 = vmatpush2.bf16.msra.mxu0 0
    %1182 = vmatprep.subr.bf16.mxu0 0
    %1183 = vmatpush2.bf16.msra.mxu0 0
    %1184 = vmatprep.subr.bf16.mxu0 0
    %1185 = vmatpush2.bf16.msra.mxu0 0
    %1186 = vmatprep.subr.bf16.mxu0 0
    %1187 = vmatpush2.bf16.msra.mxu0 0
    %1188 = vmatprep.subr.bf16.mxu0 0
    %1189 = vmatpush2.bf16.msra.mxu0 0
    %1190 = vmatprep.subr.bf16.mxu0 0
    %1191 = vmatpush2.bf16.msra.mxu0 0
    %1192 = vmatprep.subr.bf16.mxu0 0
    %1193 = vmatpush2.bf16.msra.mxu0 0
    %1194 = vmatprep.subr.bf16.mxu0 0
    %1195 = vmatpush2.bf16.msra.mxu0 0
    %1196 = vmatprep.mubr.bf16.mxu0 0
    %1197 = vmatmul.mubr.bf16.gmra.mxu0 %v1042
    %v1198 = vpop.f32.mrf.mxu0
    %v1199 = vadd.f32 %v1159, %v1198
    %v1200 = vpop.f32.mrf.mxu0
    %v1201 = vpop.f32.mrf.mxu0
    %v1202 = vpop.f32.mrf.mxu0
    %1203 = vdwg.mxu0
    %v1204 = vrsqrt.pop %v1199
    %v1205 = vmul.f32 %v1199, %v1204
    %vm1206 = vcmp.eq.f32.partialorder %v1199, inf
    %v1207 = vsel %vm1206, %v1199, %v1205
    %vm1208 = vcmp.eq.f32.partialorder %v1199, 0.0
    %v1209 = vand.u32 %v1199, 2147483648
    %v1210 = vsel %vm1208, %v1209, %v1207
    %v1211 = vld [vmem:[%s4] sm:$0xf]
    %v1212 = vld [vmem:[%s4 + $0x4] sm:$0xf]
    %v1213 = vld [vmem:[%s4 + $0x8] sm:$0xf]
    %v1214 = vld [vmem:[%s4 + $0xc] sm:$0xf]
    %v1215 = vld [vmem:[%s4 + $0x10] sm:$0xf]
    %v1216 = vld [vmem:[%s4 + $0x14] sm:$0xf]
    %v1217 = vld [vmem:[%s4 + $0x18] sm:$0xf]
    %v1218 = vld [vmem:[%s4 + $0x1c] sm:$0xf]
    %v1219 = vld [vmem:[%s5] sm:$0x1]
    %v1220 = vld [vmem:[%s6] sm:$0xf]
    %v1221 = vld [vmem:[%s6 + $0x4] sm:$0xf]
    %v1222 = vld [vmem:[%s6 + $0x8] sm:$0xf]
    %v1223 = vld [vmem:[%s6 + $0xc] sm:$0xf]
    %v1224 = vld [vmem:[%s6 + $0x10] sm:$0xf]
    %v1225 = vld [vmem:[%s6 + $0x14] sm:$0xf]
    %v1226 = vld [vmem:[%s6 + $0x18] sm:$0xf]
    %v1227 = vld [vmem:[%s6 + $0x1c] sm:$0xf]
    %v1228 = vld [vmem:[%s7] sm:$0x1]
    %v1229 = vld [vmem:[%s8] sm:$0xf]
    %v1230 = vld [vmem:[%s8 + $0x4] sm:$0xf]
    %v1231 = vld [vmem:[%s8 + $0x8] sm:$0xf]
    %v1232 = vld [vmem:[%s8 + $0xc] sm:$0xf]
    %v1233 = vld [vmem:[%s8 + $0x10] sm:$0xf]
    %v1234 = vld [vmem:[%s8 + $0x14] sm:$0xf]
    %v1235 = vld [vmem:[%s8 + $0x18] sm:$0xf]
    %v1236 = vld [vmem:[%s8 + $0x1c] sm:$0xf]
    %v1237 = vld [vmem:[%s9] sm:$0x1]
    %v1238 = vld [vmem:[%s1] sm:$0xf]
    %v1239 = vunpack.c.l.bf16 %v1238
    %v1240 = vmul.f32 %v1210, %v1239
    %v1241 = vadd.f32 %v616, %v1240
    %vm1242 = vcmp.ge.f32.partialorder %v1241, 0.0
    %v1243 = vmul.f32 %v1241, 0.01
    %v1244 = vsel %vm1242, %v1241, %v1243
    %v1245 = vpack.c.bf16 %v1244, %v1244
    %v1246 = vmul.bf16 %v1245, %v1245
    %1248 = vrot.lane.b32.xlu0 %v1246, 32
    %v1249 = vpop.permute.xlu0 %1248
    %vm1250 = vcmask 261120
    %v1253 = vsel %vm1250, %v1245, %v1249
    %v1255 = vlaneseq
    %v1256 = vshrl.u32 %v1255, 7
    %v1257 = vsub.s32 0, %v1256
    %v1258 = vrot.slane %v1219, %v1257
    %v1268 = vunpack.c.l.b16 %v1211
    %v1269 = vunpack.c.l.b16 %v1212
    %v1270 = vunpack.c.l.b16 %v1213
    %v1271 = vunpack.c.l.b16 %v1214
    %v1272 = vunpack.c.l.b16 %v1215
    %v1273 = vunpack.c.l.b16 %v1216
    %v1274 = vunpack.c.l.b16 %v1217
    %v1275 = vunpack.c.l.b16 %v1218
    %v1276 = vpack.c.b16 %v1269, %v1268
    %v1277 = vpack.c.b16 %v1271, %v1270
    %v1278 = vpack.c.b16 %v1273, %v1272
    %v1279 = vpack.c.b16 %v1275, %v1274
    %vm1284 = vcmask 523264
    %v1285 = vsel %vm1284, %v1253, 0
    %1287 = vmatprep.subr.bf16.mxu0 0
    %1288 = vmatpush1.bf16.msra.mxu0 0
    %1289 = vmatprep.subr.bf16.mxu0 0
    %1290 = vmatpush1.bf16.msra.mxu0 0
    %1291 = vmatprep.subr.bf16.mxu0 0
    %1292 = vmatpush1.bf16.msra.mxu0 0
    %1293 = vmatprep.subr.bf16.mxu0 0
    %1294 = vmatpush1.bf16.msra.mxu0 0
    %1295 = vmatprep.subr.bf16.mxu0 0
    %1296 = vmatpush1.bf16.msra.mxu0 %v1279
    %1297 = vmatprep.subr.bf16.mxu0 0
    %1298 = vmatpush1.bf16.msra.mxu0 %v1278
    %1299 = vmatprep.subr.bf16.mxu0 0
    %1300 = vmatpush1.bf16.msra.mxu0 %v1277
    %1301 = vmatprep.subr.bf16.mxu0 0
    %1302 = vmatpush1.bf16.msra.mxu0 %v1276
    %1303 = vmatprep.subr.bf16.mxu0 0
    %1304 = vmatpush2.bf16.msra.mxu0 0
    %1305 = vmatprep.subr.bf16.mxu0 0
    %1306 = vmatpush2.bf16.msra.mxu0 0
    %1307 = vmatprep.subr.bf16.mxu0 0
    %1308 = vmatpush2.bf16.msra.mxu0 0
    %1309 = vmatprep.subr.bf16.mxu0 0
    %1310 = vmatpush2.bf16.msra.mxu0 0
    %1311 = vmatprep.subr.bf16.mxu0 0
    %1312 = vmatpush2.bf16.msra.mxu0 0
    %1313 = vmatprep.subr.bf16.mxu0 0
    %1314 = vmatpush2.bf16.msra.mxu0 0
    %1315 = vmatprep.subr.bf16.mxu0 0
    %1316 = vmatpush2.bf16.msra.mxu0 0
    %1317 = vmatprep.subr.bf16.mxu0 0
    %1318 = vmatpush2.bf16.msra.mxu0 0
    %1319 = vmatprep.mubr.bf16.mxu0 0
    %1320 = vmatmul.mubr.bf16.gmra.mxu0 %v1285
    %v1321 = vpop.f32.mrf.mxu0
    %v1322 = vadd.f32 %v1258, %v1321
    %v1323 = vpop.f32.mrf.mxu0
    %v1324 = vpop.f32.mrf.mxu0
    %v1325 = vpop.f32.mrf.mxu0
    %1326 = vdwg.mxu0
    %v1327 = vrsqrt.pop %v1322
    %v1328 = vmul.f32 %v1322, %v1327
    %vm1329 = vcmp.eq.f32.partialorder %v1322, inf
    %v1330 = vsel %vm1329, %v1322, %v1328
    %vm1331 = vcmp.eq.f32.partialorder %v1322, 0.0
    %v1332 = vand.u32 %v1322, 2147483648
    %v1333 = vsel %vm1331, %v1332, %v1330
    %v1334 = vmul.f32 %v1333, %v1239
    %1336 = vrot.lane.b32.xlu0 %v1334, 96
    %v1337 = vpop.permute.xlu0 %1336
    %v1339 = vadd.f32 %v1322, %v1337
    %vm1340 = vcmp.ge.f32.partialorder %v1339, 0.0
    %v1341 = vmul.f32 %v1339, 0.01
    %v1342 = vsel %vm1340, %v1339, %v1341
    %v1343 = vpack.c.bf16 %v1342, %v1342
    %v1344 = vmul.bf16 %v1343, %v1343
    %1346 = vrot.lane.b32.xlu0 %v1344, 32
    %v1347 = vpop.permute.xlu0 %1346
    %v1350 = vsel %vm1250, %v1343, %v1347
    %v1352 = vlaneseq
    %v1353 = vshrl.u32 %v1352, 7
    %v1354 = vsub.s32 0, %v1353
    %v1355 = vrot.slane %v1228, %v1354
    %v1365 = vunpack.c.l.b16 %v1220
    %v1366 = vunpack.c.l.b16 %v1221
    %v1367 = vunpack.c.l.b16 %v1222
    %v1368 = vunpack.c.l.b16 %v1223
    %v1369 = vunpack.c.l.b16 %v1224
    %v1370 = vunpack.c.l.b16 %v1225
    %v1371 = vunpack.c.l.b16 %v1226
    %v1372 = vunpack.c.l.b16 %v1227
    %v1373 = vpack.c.b16 %v1366, %v1365
    %v1374 = vpack.c.b16 %v1368, %v1367
    %v1375 = vpack.c.b16 %v1370, %v1369
    %v1376 = vpack.c.b16 %v1372, %v1371
    %v1381 = vsel %vm1284, %v1350, 0
    %1383 = vmatprep.subr.bf16.mxu0 0
    %1384 = vmatpush1.bf16.msra.mxu0 0
    %1385 = vmatprep.subr.bf16.mxu0 0
    %1386 = vmatpush1.bf16.msra.mxu0 0
    %1387 = vmatprep.subr.bf16.mxu0 0
    %1388 = vmatpush1.bf16.msra.mxu0 0
    %1389 = vmatprep.subr.bf16.mxu0 0
    %1390 = vmatpush1.bf16.msra.mxu0 0
    %1391 = vmatprep.subr.bf16.mxu0 0
    %1392 = vmatpush1.bf16.msra.mxu0 %v1376
    %1393 = vmatprep.subr.bf16.mxu0 0
    %1394 = vmatpush1.bf16.msra.mxu0 %v1375
    %1395 = vmatprep.subr.bf16.mxu0 0
    %1396 = vmatpush1.bf16.msra.mxu0 %v1374
    %1397 = vmatprep.subr.bf16.mxu0 0
    %1398 = vmatpush1.bf16.msra.mxu0 %v1373
    %1399 = vmatprep.subr.bf16.mxu0 0
    %1400 = vmatpush2.bf16.msra.mxu0 0
    %1401 = vmatprep.subr.bf16.mxu0 0
    %1402 = vmatpush2.bf16.msra.mxu0 0
    %1403 = vmatprep.subr.bf16.mxu0 0
    %1404 = vmatpush2.bf16.msra.mxu0 0
    %1405 = vmatprep.subr.bf16.mxu0 0
    %1406 = vmatpush2.bf16.msra.mxu0 0
    %1407 = vmatprep.subr.bf16.mxu0 0
    %1408 = vmatpush2.bf16.msra.mxu0 0
    %1409 = vmatprep.subr.bf16.mxu0 0
    %1410 = vmatpush2.bf16.msra.mxu0 0
    %1411 = vmatprep.subr.bf16.mxu0 0
    %1412 = vmatpush2.bf16.msra.mxu0 0
    %1413 = vmatprep.subr.bf16.mxu0 0
    %1414 = vmatpush2.bf16.msra.mxu0 0
    %1415 = vmatprep.mubr.bf16.mxu0 0
    %1416 = vmatmul.mubr.bf16.gmra.mxu0 %v1381
    %v1417 = vpop.f32.mrf.mxu0
    %v1418 = vadd.f32 %v1355, %v1417
    %v1419 = vpop.f32.mrf.mxu0
    %v1420 = vpop.f32.mrf.mxu0
    %v1421 = vpop.f32.mrf.mxu0
    %1422 = vdwg.mxu0
    %v1423 = vrsqrt.pop %v1418
    %v1424 = vmul.f32 %v1418, %v1423
    %vm1425 = vcmp.eq.f32.partialorder %v1418, inf
    %v1426 = vsel %vm1425, %v1418, %v1424
    %vm1427 = vcmp.eq.f32.partialorder %v1418, 0.0
    %v1428 = vand.u32 %v1418, 2147483648
    %v1429 = vsel %vm1427, %v1428, %v1426
    %1431 = vrot.lane.b32.xlu0 %v1239, 96
    %v1432 = vpop.permute.xlu0 %1431
    %v1434 = vmul.f32 %v1429, %v1432
    %1436 = vrot.lane.b32.xlu0 %v1434, 96
    %v1437 = vpop.permute.xlu0 %1436
    %v1439 = vadd.f32 %v1418, %v1437
    %vm1440 = vcmp.ge.f32.partialorder %v1439, 0.0
    %v1441 = vmul.f32 %v1439, 0.01
    %v1442 = vsel %vm1440, %v1439, %v1441
    %v1443 = vpack.c.bf16 %v1442, %v1442
    %v1444 = vmul.bf16 %v1443, %v1443
    %1446 = vrot.lane.b32.xlu0 %v1444, 32
    %v1447 = vpop.permute.xlu0 %1446
    %v1450 = vsel %vm1250, %v1443, %v1447
    %v1452 = vlaneseq
    %v1453 = vshrl.u32 %v1452, 7
    %v1454 = vsub.s32 0, %v1453
    %v1455 = vrot.slane %v1237, %v1454
    %v1465 = vunpack.c.l.b16 %v1229
    %v1466 = vunpack.c.l.b16 %v1230
    %v1467 = vunpack.c.l.b16 %v1231
    %v1468 = vunpack.c.l.b16 %v1232
    %v1469 = vunpack.c.l.b16 %v1233
    %v1470 = vunpack.c.l.b16 %v1234
    %v1471 = vunpack.c.l.b16 %v1235
    %v1472 = vunpack.c.l.b16 %v1236
    %v1473 = vpack.c.b16 %v1466, %v1465
    %v1474 = vpack.c.b16 %v1468, %v1467
    %v1475 = vpack.c.b16 %v1470, %v1469
    %v1476 = vpack.c.b16 %v1472, %v1471
    %v1481 = vsel %vm1284, %v1450, 0
    %1483 = vmatprep.subr.bf16.mxu0 0
    %1484 = vmatpush1.bf16.msra.mxu0 0
    %1485 = vmatprep.subr.bf16.mxu0 0
    %1486 = vmatpush1.bf16.msra.mxu0 0
    %1487 = vmatprep.subr.bf16.mxu0 0
    %1488 = vmatpush1.bf16.msra.mxu0 0
    %1489 = vmatprep.subr.bf16.mxu0 0
    %1490 = vmatpush1.bf16.msra.mxu0 0
    %1491 = vmatprep.subr.bf16.mxu0 0
    %1492 = vmatpush1.bf16.msra.mxu0 %v1476
    %1493 = vmatprep.subr.bf16.mxu0 0
    %1494 = vmatpush1.bf16.msra.mxu0 %v1475
    %1495 = vmatprep.subr.bf16.mxu0 0
    %1496 = vmatpush1.bf16.msra.mxu0 %v1474
    %1497 = vmatprep.subr.bf16.mxu0 0
    %1498 = vmatpush1.bf16.msra.mxu0 %v1473
    %1499 = vmatprep.subr.bf16.mxu0 0
    %1500 = vmatpush2.bf16.msra.mxu0 0
    %1501 = vmatprep.subr.bf16.mxu0 0
    %1502 = vmatpush2.bf16.msra.mxu0 0
    %1503 = vmatprep.subr.bf16.mxu0 0
    %1504 = vmatpush2.bf16.msra.mxu0 0
    %1505 = vmatprep.subr.bf16.mxu0 0
    %1506 = vmatpush2.bf16.msra.mxu0 0
    %1507 = vmatprep.subr.bf16.mxu0 0
    %1508 = vmatpush2.bf16.msra.mxu0 0
    %1509 = vmatprep.subr.bf16.mxu0 0
    %1510 = vmatpush2.bf16.msra.mxu0 0
    %1511 = vmatprep.subr.bf16.mxu0 0
    %1512 = vmatpush2.bf16.msra.mxu0 0
    %1513 = vmatprep.subr.bf16.mxu0 0
    %1514 = vmatpush2.bf16.msra.mxu0 0
    %1515 = vmatprep.mubr.bf16.mxu0 0
    %1516 = vmatmul.mubr.bf16.gmra.mxu0 %v1481
    %v1517 = vpop.f32.mrf.mxu0
    %v1518 = vadd.f32 %v1455, %v1517
    %v1519 = vpop.f32.mrf.mxu0
    %v1520 = vpop.f32.mrf.mxu0
    %v1521 = vpop.f32.mrf.mxu0
    %1522 = vdwg.mxu0
    %v1523 = vrsqrt.pop %v1518
    %v1524 = vmul.f32 %v1518, %v1523
    %vm1525 = vcmp.eq.f32.partialorder %v1518, inf
    %v1526 = vsel %vm1525, %v1518, %v1524
    %vm1527 = vcmp.eq.f32.partialorder %v1518, 0.0
    %v1528 = vand.u32 %v1518, 2147483648
    %v1529 = vsel %vm1527, %v1528, %v1526
    %1530 = vrot.lane.b32.xlu0 %v1239, 42
    %v1531 = vpop.permute.xlu0 %1530
    %v1533 = vmul.f32 %v1529, %v1531
    %1535 = vrot.lane.b32.xlu0 %v1533, 118
    %v1536 = vpop.permute.xlu0 %1535
    %v1538 = vadd.f32 %v1518, %v1536
    %vm1539 = vcmask 80896
    %v1540 = vsel %vm1539, %v1538, -inf
    %1541 = vmax.xlane.f32.xlu0 %v1540
    %v1542 = vpop.xlane.xlu0 %1541
    %v1543 = vsub.f32 %v1538, %v1542
    %v1544 = vmul.f32 %v1543, 1.442695
    %v1545 = vpow.pop %v1544
    %v1546 = vsel %vm1539, %v1545, 0.0
    %1547 = vadd.xlane.f32.xlu0 %v1546
    %v1548 = vpop.xlane.xlu0 %1547
    %v1549 = vlog2.pop %v1548
    %v1550 = vmul.f32 %v1549, 0.6931472
    %v1551 = vsub.f32 %v1543, %v1550
    %1552 = vst.msk [vmem:[#allocation2] sm:$0xff] %vm1539, %v1551
    %s1553 = scalar_lea.vmem %s1, 4
    %v1554 = vld [vmem:[%s1553] sm:$0xf]
    %v1555 = vunpack.c.l.bf16 %v1554
    %v1556 = vmul.f32 %v1210, %v1555
    %v1557 = vadd.f32 %v616, %v1556
    %vm1558 = vcmp.ge.f32.partialorder %v1557, 0.0
    %v1559 = vmul.f32 %v1557, 0.01
    %v1560 = vsel %vm1558, %v1557, %v1559
    %v1561 = vpack.c.bf16 %v1560, %v1560
    %v1562 = vmul.bf16 %v1561, %v1561
    %1564 = vrot.lane.b32.xlu0 %v1562, 32
    %v1565 = vpop.permute.xlu0 %1564
    %v1568 = vsel %vm1250, %v1561, %v1565
    %v1569 = vsel %vm1284, %v1568, 0
    %1571 = vmatprep.subr.bf16.mxu0 0
    %1572 = vmatpush1.bf16.msra.mxu0 0
    %1573 = vmatprep.subr.bf16.mxu0 0
    %1574 = vmatpush1.bf16.msra.mxu0 0
    %1575 = vmatprep.subr.bf16.mxu0 0
    %1576 = vmatpush1.bf16.msra.mxu0 0
    %1577 = vmatprep.subr.bf16.mxu0 0
    %1578 = vmatpush1.bf16.msra.mxu0 0
    %1579 = vmatprep.subr.bf16.mxu0 0
    %1580 = vmatpush1.bf16.msra.mxu0 %v1279
    %1581 = vmatprep.subr.bf16.mxu0 0
    %1582 = vmatpush1.bf16.msra.mxu0 %v1278
    %1583 = vmatprep.subr.bf16.mxu0 0
    %1584 = vmatpush1.bf16.msra.mxu0 %v1277
    %1585 = vmatprep.subr.bf16.mxu0 0
    %1586 = vmatpush1.bf16.msra.mxu0 %v1276
    %1587 = vmatprep.subr.bf16.mxu0 0
    %1588 = vmatpush2.bf16.msra.mxu0 0
    %1589 = vmatprep.subr.bf16.mxu0 0
    %1590 = vmatpush2.bf16.msra.mxu0 0
    %1591 = vmatprep.subr.bf16.mxu0 0
    %1592 = vmatpush2.bf16.msra.mxu0 0
    %1593 = vmatprep.subr.bf16.mxu0 0
    %1594 = vmatpush2.bf16.msra.mxu0 0
    %1595 = vmatprep.subr.bf16.mxu0 0
    %1596 = vmatpush2.bf16.msra.mxu0 0
    %1597 = vmatprep.subr.bf16.mxu0 0
    %1598 = vmatpush2.bf16.msra.mxu0 0
    %1599 = vmatprep.subr.bf16.mxu0 0
    %1600 = vmatpush2.bf16.msra.mxu0 0
    %1601 = vmatprep.subr.bf16.mxu0 0
    %1602 = vmatpush2.bf16.msra.mxu0 0
    %1603 = vmatprep.mubr.bf16.mxu0 0
    %1604 = vmatmul.mubr.bf16.gmra.mxu0 %v1569
    %v1605 = vpop.f32.mrf.mxu0
    %v1606 = vadd.f32 %v1258, %v1605
    %v1607 = vpop.f32.mrf.mxu0
    %v1608 = vpop.f32.mrf.mxu0
    %v1609 = vpop.f32.mrf.mxu0
    %1610 = vdwg.mxu0
    %v1611 = vrsqrt.pop %v1606
    %v1612 = vmul.f32 %v1606, %v1611
    %vm1613 = vcmp.eq.f32.partialorder %v1606, inf
    %v1614 = vsel %vm1613, %v1606, %v1612
    %vm1615 = vcmp.eq.f32.partialorder %v1606, 0.0
    %v1616 = vand.u32 %v1606, 2147483648
    %v1617 = vsel %vm1615, %v1616, %v1614
    %v1618 = vmul.f32 %v1617, %v1555
    %1620 = vrot.lane.b32.xlu0 %v1618, 96
    %v1621 = vpop.permute.xlu0 %1620
    %v1623 = vadd.f32 %v1606, %v1621
    %vm1624 = vcmp.ge.f32.partialorder %v1623, 0.0
    %v1625 = vmul.f32 %v1623, 0.01
    %v1626 = vsel %vm1624, %v1623, %v1625
    %v1627 = vpack.c.bf16 %v1626, %v1626
    %v1628 = vmul.bf16 %v1627, %v1627
    %1630 = vrot.lane.b32.xlu0 %v1628, 32
    %v1631 = vpop.permute.xlu0 %1630
    %v1634 = vsel %vm1250, %v1627, %v1631
    %v1635 = vsel %vm1284, %v1634, 0
    %1637 = vmatprep.subr.bf16.mxu0 0
    %1638 = vmatpush1.bf16.msra.mxu0 0
    %1639 = vmatprep.subr.bf16.mxu0 0
    %1640 = vmatpush1.bf16.msra.mxu0 0
    %1641 = vmatprep.subr.bf16.mxu0 0
    %1642 = vmatpush1.bf16.msra.mxu0 0
    %1643 = vmatprep.subr.bf16.mxu0 0
    %1644 = vmatpush1.bf16.msra.mxu0 0
    %1645 = vmatprep.subr.bf16.mxu0 0
    %1646 = vmatpush1.bf16.msra.mxu0 %v1376
    %1647 = vmatprep.subr.bf16.mxu0 0
    %1648 = vmatpush1.bf16.msra.mxu0 %v1375
    %1649 = vmatprep.subr.bf16.mxu0 0
    %1650 = vmatpush1.bf16.msra.mxu0 %v1374
    %1651 = vmatprep.subr.bf16.mxu0 0
    %1652 = vmatpush1.bf16.msra.mxu0 %v1373
    %1653 = vmatprep.subr.bf16.mxu0 0
    %1654 = vmatpush2.bf16.msra.mxu0 0
    %1655 = vmatprep.subr.bf16.mxu0 0
    %1656 = vmatpush2.bf16.msra.mxu0 0
    %1657 = vmatprep.subr.bf16.mxu0 0
    %1658 = vmatpush2.bf16.msra.mxu0 0
    %1659 = vmatprep.subr.bf16.mxu0 0
    %1660 = vmatpush2.bf16.msra.mxu0 0
    %1661 = vmatprep.subr.bf16.mxu0 0
    %1662 = vmatpush2.bf16.msra.mxu0 0
    %1663 = vmatprep.subr.bf16.mxu0 0
    %1664 = vmatpush2.bf16.msra.mxu0 0
    %1665 = vmatprep.subr.bf16.mxu0 0
    %1666 = vmatpush2.bf16.msra.mxu0 0
    %1667 = vmatprep.subr.bf16.mxu0 0
    %1668 = vmatpush2.bf16.msra.mxu0 0
    %1669 = vmatprep.mubr.bf16.mxu0 0
    %1670 = vmatmul.mubr.bf16.gmra.mxu0 %v1635
    %v1671 = vpop.f32.mrf.mxu0
    %v1672 = vadd.f32 %v1355, %v1671
    %v1673 = vpop.f32.mrf.mxu0
    %v1674 = vpop.f32.mrf.mxu0
    %v1675 = vpop.f32.mrf.mxu0
    %1676 = vdwg.mxu0
    %v1677 = vrsqrt.pop %v1672
    %v1678 = vmul.f32 %v1672, %v1677
    %vm1679 = vcmp.eq.f32.partialorder %v1672, inf
    %v1680 = vsel %vm1679, %v1672, %v1678
    %vm1681 = vcmp.eq.f32.partialorder %v1672, 0.0
    %v1682 = vand.u32 %v1672, 2147483648
    %v1683 = vsel %vm1681, %v1682, %v1680
    %1685 = vrot.lane.b32.xlu0 %v1555, 96
    %v1686 = vpop.permute.xlu0 %1685
    %v1688 = vmul.f32 %v1683, %v1686
    %1690 = vrot.lane.b32.xlu0 %v1688, 96
    %v1691 = vpop.permute.xlu0 %1690
    %v1693 = vadd.f32 %v1672, %v1691
    %vm1694 = vcmp.ge.f32.partialorder %v1693, 0.0
    %v1695 = vmul.f32 %v1693, 0.01
    %v1696 = vsel %vm1694, %v1693, %v1695
    %v1697 = vpack.c.bf16 %v1696, %v1696
    %v1698 = vmul.bf16 %v1697, %v1697
    %1700 = vrot.lane.b32.xlu0 %v1698, 32
    %v1701 = vpop.permute.xlu0 %1700
    %v1704 = vsel %vm1250, %v1697, %v1701
    %v1705 = vsel %vm1284, %v1704, 0
    %1707 = vmatprep.subr.bf16.mxu0 0
    %1708 = vmatpush1.bf16.msra.mxu0 0
    %1709 = vmatprep.subr.bf16.mxu0 0
    %1710 = vmatpush1.bf16.msra.mxu0 0
    %1711 = vmatprep.subr.bf16.mxu0 0
    %1712 = vmatpush1.bf16.msra.mxu0 0
    %1713 = vmatprep.subr.bf16.mxu0 0
    %1714 = vmatpush1.bf16.msra.mxu0 0
    %1715 = vmatprep.subr.bf16.mxu0 0
    %1716 = vmatpush1.bf16.msra.mxu0 %v1476
    %1717 = vmatprep.subr.bf16.mxu0 0
    %1718 = vmatpush1.bf16.msra.mxu0 %v1475
    %1719 = vmatprep.subr.bf16.mxu0 0
    %1720 = vmatpush1.bf16.msra.mxu0 %v1474
    %1721 = vmatprep.subr.bf16.mxu0 0
    %1722 = vmatpush1.bf16.msra.mxu0 %v1473
    %1723 = vmatprep.subr.bf16.mxu0 0
    %1724 = vmatpush2.bf16.msra.mxu0 0
    %1725 = vmatprep.subr.bf16.mxu0 0
    %1726 = vmatpush2.bf16.msra.mxu0 0
    %1727 = vmatprep.subr.bf16.mxu0 0
    %1728 = vmatpush2.bf16.msra.mxu0 0
    %1729 = vmatprep.subr.bf16.mxu0 0
    %1730 = vmatpush2.bf16.msra.mxu0 0
    %1731 = vmatprep.subr.bf16.mxu0 0
    %1732 = vmatpush2.bf16.msra.mxu0 0
    %1733 = vmatprep.subr.bf16.mxu0 0
    %1734 = vmatpush2.bf16.msra.mxu0 0
    %1735 = vmatprep.subr.bf16.mxu0 0
    %1736 = vmatpush2.bf16.msra.mxu0 0
    %1737 = vmatprep.subr.bf16.mxu0 0
    %1738 = vmatpush2.bf16.msra.mxu0 0
    %1739 = vmatprep.mubr.bf16.mxu0 0
    %1740 = vmatmul.mubr.bf16.gmra.mxu0 %v1705
    %v1741 = vpop.f32.mrf.mxu0
    %v1742 = vadd.f32 %v1455, %v1741
    %v1743 = vpop.f32.mrf.mxu0
    %v1744 = vpop.f32.mrf.mxu0
    %v1745 = vpop.f32.mrf.mxu0
    %1746 = vdwg.mxu0
    %v1747 = vrsqrt.pop %v1742
    %v1748 = vmul.f32 %v1742, %v1747
    %vm1749 = vcmp.eq.f32.partialorder %v1742, inf
    %v1750 = vsel %vm1749, %v1742, %v1748
    %vm1751 = vcmp.eq.f32.partialorder %v1742, 0.0
    %v1752 = vand.u32 %v1742, 2147483648
    %v1753 = vsel %vm1751, %v1752, %v1750
    %1754 = vrot.lane.b32.xlu0 %v1555, 42
    %v1755 = vpop.permute.xlu0 %1754
    %v1757 = vmul.f32 %v1753, %v1755
    %1759 = vrot.lane.b32.xlu0 %v1757, 118
    %v1760 = vpop.permute.xlu0 %1759
    %v1762 = vadd.f32 %v1742, %v1760
    %v1763 = vsel %vm1539, %v1762, -inf
    %1764 = vmax.xlane.f32.xlu0 %v1763
    %v1765 = vpop.xlane.xlu0 %1764
    %v1766 = vsub.f32 %v1762, %v1765
    %v1767 = vmul.f32 %v1766, 1.442695
    %v1768 = vpow.pop %v1767
    %v1769 = vsel %vm1539, %v1768, 0.0
    %1770 = vadd.xlane.f32.xlu0 %v1769
    %v1771 = vpop.xlane.xlu0 %1770
    %v1772 = vlog2.pop %v1771
    %v1773 = vmul.f32 %v1772, 0.6931472
    %v1774 = vsub.f32 %v1766, %v1773
    %1776 = vrot.lane.b32.xlu0 %v1774, 10
    %v1777 = vpop.permute.xlu0 %1776
    %vm1779 = vcmask 162896
    %1780 = vst.msk [vmem:[#allocation2] sm:$0xff] %vm1779, %v1777
    %s1781 = scalar_lea.vmem %s1, 8
    %v1782 = vld [vmem:[%s1781] sm:$0xf]
    %v1783 = vunpack.c.l.bf16 %v1782
    %v1784 = vmul.f32 %v1210, %v1783
    %v1785 = vadd.f32 %v616, %v1784
    %vm1786 = vcmp.ge.f32.partialorder %v1785, 0.0
    %v1787 = vmul.f32 %v1785, 0.01
    %v1788 = vsel %vm1786, %v1785, %v1787
    %v1789 = vpack.c.bf16 %v1788, %v1788
    %v1790 = vmul.bf16 %v1789, %v1789
    %1792 = vrot.lane.b32.xlu0 %v1790, 32
    %v1793 = vpop.permute.xlu0 %1792
    %v1796 = vsel %vm1250, %v1789, %v1793
    %v1797 = vsel %vm1284, %v1796, 0
    %1799 = vmatprep.subr.bf16.mxu0 0
    %1800 = vmatpush1.bf16.msra.mxu0 0
    %1801 = vmatprep.subr.bf16.mxu0 0
    %1802 = vmatpush1.bf16.msra.mxu0 0
    %1803 = vmatprep.subr.bf16.mxu0 0
    %1804 = vmatpush1.bf16.msra.mxu0 0
    %1805 = vmatprep.subr.bf16.mxu0 0
    %1806 = vmatpush1.bf16.msra.mxu0 0
    %1807 = vmatprep.subr.bf16.mxu0 0
    %1808 = vmatpush1.bf16.msra.mxu0 %v1279
    %1809 = vmatprep.subr.bf16.mxu0 0
    %1810 = vmatpush1.bf16.msra.mxu0 %v1278
    %1811 = vmatprep.subr.bf16.mxu0 0
    %1812 = vmatpush1.bf16.msra.mxu0 %v1277
    %1813 = vmatprep.subr.bf16.mxu0 0
    %1814 = vmatpush1.bf16.msra.mxu0 %v1276
    %1815 = vmatprep.subr.bf16.mxu0 0
    %1816 = vmatpush2.bf16.msra.mxu0 0
    %1817 = vmatprep.subr.bf16.mxu0 0
    %1818 = vmatpush2.bf16.msra.mxu0 0
    %1819 = vmatprep.subr.bf16.mxu0 0
    %1820 = vmatpush2.bf16.msra.mxu0 0
    %1821 = vmatprep.subr.bf16.mxu0 0
    %1822 = vmatpush2.bf16.msra.mxu0 0
    %1823 = vmatprep.subr.bf16.mxu0 0
    %1824 = vmatpush2.bf16.msra.mxu0 0
    %1825 = vmatprep.subr.bf16.mxu0 0
    %1826 = vmatpush2.bf16.msra.mxu0 0
    %1827 = vmatprep.subr.bf16.mxu0 0
    %1828 = vmatpush2.bf16.msra.mxu0 0
    %1829 = vmatprep.subr.bf16.mxu0 0
    %1830 = vmatpush2.bf16.msra.mxu0 0
    %1831 = vmatprep.mubr.bf16.mxu0 0
    %1832 = vmatmul.mubr.bf16.gmra.mxu0 %v1797
    %v1833 = vpop.f32.mrf.mxu0
    %v1834 = vadd.f32 %v1258, %v1833
    %v1835 = vpop.f32.mrf.mxu0
    %v1836 = vpop.f32.mrf.mxu0
    %v1837 = vpop.f32.mrf.mxu0
    %1838 = vdwg.mxu0
    %v1839 = vrsqrt.pop %v1834
    %v1840 = vmul.f32 %v1834, %v1839
    %vm1841 = vcmp.eq.f32.partialorder %v1834, inf
    %v1842 = vsel %vm1841, %v1834, %v1840
    %vm1843 = vcmp.eq.f32.partialorder %v1834, 0.0
    %v1844 = vand.u32 %v1834, 2147483648
    %v1845 = vsel %vm1843, %v1844, %v1842
    %v1846 = vmul.f32 %v1845, %v1783
    %1848 = vrot.lane.b32.xlu0 %v1846, 96
    %v1849 = vpop.permute.xlu0 %1848
    %v1851 = vadd.f32 %v1834, %v1849
    %vm1852 = vcmp.ge.f32.partialorder %v1851, 0.0
    %v1853 = vmul.f32 %v1851, 0.01
    %v1854 = vsel %vm1852, %v1851, %v1853
    %v1855 = vpack.c.bf16 %v1854, %v1854
    %v1856 = vmul.bf16 %v1855, %v1855
    %1858 = vrot.lane.b32.xlu0 %v1856, 32
    %v1859 = vpop.permute.xlu0 %1858
    %v1862 = vsel %vm1250, %v1855, %v1859
    %v1863 = vsel %vm1284, %v1862, 0
    %1865 = vmatprep.subr.bf16.mxu0 0
    %1866 = vmatpush1.bf16.msra.mxu0 0
    %1867 = vmatprep.subr.bf16.mxu0 0
    %1868 = vmatpush1.bf16.msra.mxu0 0
    %1869 = vmatprep.subr.bf16.mxu0 0
    %1870 = vmatpush1.bf16.msra.mxu0 0
    %1871 = vmatprep.subr.bf16.mxu0 0
    %1872 = vmatpush1.bf16.msra.mxu0 0
    %1873 = vmatprep.subr.bf16.mxu0 0
    %1874 = vmatpush1.bf16.msra.mxu0 %v1376
    %1875 = vmatprep.subr.bf16.mxu0 0
    %1876 = vmatpush1.bf16.msra.mxu0 %v1375
    %1877 = vmatprep.subr.bf16.mxu0 0
    %1878 = vmatpush1.bf16.msra.mxu0 %v1374
    %1879 = vmatprep.subr.bf16.mxu0 0
    %1880 = vmatpush1.bf16.msra.mxu0 %v1373
    %1881 = vmatprep.subr.bf16.mxu0 0
    %1882 = vmatpush2.bf16.msra.mxu0 0
    %1883 = vmatprep.subr.bf16.mxu0 0
    %1884 = vmatpush2.bf16.msra.mxu0 0
    %1885 = vmatprep.subr.bf16.mxu0 0
    %1886 = vmatpush2.bf16.msra.mxu0 0
    %1887 = vmatprep.subr.bf16.mxu0 0
    %1888 = vmatpush2.bf16.msra.mxu0 0
    %1889 = vmatprep.subr.bf16.mxu0 0
    %1890 = vmatpush2.bf16.msra.mxu0 0
    %1891 = vmatprep.subr.bf16.mxu0 0
    %1892 = vmatpush2.bf16.msra.mxu0 0
    %1893 = vmatprep.subr.bf16.mxu0 0
    %1894 = vmatpush2.bf16.msra.mxu0 0
    %1895 = vmatprep.subr.bf16.mxu0 0
    %1896 = vmatpush2.bf16.msra.mxu0 0
    %1897 = vmatprep.mubr.bf16.mxu0 0
    %1898 = vmatmul.mubr.bf16.gmra.mxu0 %v1863
    %v1899 = vpop.f32.mrf.mxu0
    %v1900 = vadd.f32 %v1355, %v1899
    %v1901 = vpop.f32.mrf.mxu0
    %v1902 = vpop.f32.mrf.mxu0
    %v1903 = vpop.f32.mrf.mxu0
    %1904 = vdwg.mxu0
    %v1905 = vrsqrt.pop %v1900
    %v1906 = vmul.f32 %v1900, %v1905
    %vm1907 = vcmp.eq.f32.partialorder %v1900, inf
    %v1908 = vsel %vm1907, %v1900, %v1906
    %vm1909 = vcmp.eq.f32.partialorder %v1900, 0.0
    %v1910 = vand.u32 %v1900, 2147483648
    %v1911 = vsel %vm1909, %v1910, %v1908
    %1913 = vrot.lane.b32.xlu0 %v1783, 96
    %v1914 = vpop.permute.xlu0 %1913
    %v1916 = vmul.f32 %v1911, %v1914
    %1918 = vrot.lane.b32.xlu0 %v1916, 96
    %v1919 = vpop.permute.xlu0 %1918
    %v1921 = vadd.f32 %v1900, %v1919
    %vm1922 = vcmp.ge.f32.partialorder %v1921, 0.0
    %v1923 = vmul.f32 %v1921, 0.01
    %v1924 = vsel %vm1922, %v1921, %v1923
    %v1925 = vpack.c.bf16 %v1924, %v1924
    %v1926 = vmul.bf16 %v1925, %v1925
    %1928 = vrot.lane.b32.xlu0 %v1926, 32
    %v1929 = vpop.permute.xlu0 %1928
    %v1932 = vsel %vm1250, %v1925, %v1929
    %v1933 = vsel %vm1284, %v1932, 0
    %1935 = vmatprep.subr.bf16.mxu0 0
    %1936 = vmatpush1.bf16.msra.mxu0 0
    %1937 = vmatprep.subr.bf16.mxu0 0
    %1938 = vmatpush1.bf16.msra.mxu0 0
    %1939 = vmatprep.subr.bf16.mxu0 0
    %1940 = vmatpush1.bf16.msra.mxu0 0
    %1941 = vmatprep.subr.bf16.mxu0 0
    %1942 = vmatpush1.bf16.msra.mxu0 0
    %1943 = vmatprep.subr.bf16.mxu0 0
    %1944 = vmatpush1.bf16.msra.mxu0 %v1476
    %1945 = vmatprep.subr.bf16.mxu0 0
    %1946 = vmatpush1.bf16.msra.mxu0 %v1475
    %1947 = vmatprep.subr.bf16.mxu0 0
    %1948 = vmatpush1.bf16.msra.mxu0 %v1474
    %1949 = vmatprep.subr.bf16.mxu0 0
    %1950 = vmatpush1.bf16.msra.mxu0 %v1473
    %1951 = vmatprep.subr.bf16.mxu0 0
    %1952 = vmatpush2.bf16.msra.mxu0 0
    %1953 = vmatprep.subr.bf16.mxu0 0
    %1954 = vmatpush2.bf16.msra.mxu0 0
    %1955 = vmatprep.subr.bf16.mxu0 0
    %1956 = vmatpush2.bf16.msra.mxu0 0
    %1957 = vmatprep.subr.bf16.mxu0 0
    %1958 = vmatpush2.bf16.msra.mxu0 0
    %1959 = vmatprep.subr.bf16.mxu0 0
    %1960 = vmatpush2.bf16.msra.mxu0 0
    %1961 = vmatprep.subr.bf16.mxu0 0
    %1962 = vmatpush2.bf16.msra.mxu0 0
    %1963 = vmatprep.subr.bf16.mxu0 0
    %1964 = vmatpush2.bf16.msra.mxu0 0
    %1965 = vmatprep.subr.bf16.mxu0 0
    %1966 = vmatpush2.bf16.msra.mxu0 0
    %1967 = vmatprep.mubr.bf16.mxu0 0
    %1968 = vmatmul.mubr.bf16.gmra.mxu0 %v1933
    %v1969 = vpop.f32.mrf.mxu0
    %v1970 = vadd.f32 %v1455, %v1969
    %v1971 = vpop.f32.mrf.mxu0
    %v1972 = vpop.f32.mrf.mxu0
    %v1973 = vpop.f32.mrf.mxu0
    %1974 = vdwg.mxu0
    %v1975 = vrsqrt.pop %v1970
    %v1976 = vmul.f32 %v1970, %v1975
    %vm1977 = vcmp.eq.f32.partialorder %v1970, inf
    %v1978 = vsel %vm1977, %v1970, %v1976
    %vm1979 = vcmp.eq.f32.partialorder %v1970, 0.0
    %v1980 = vand.u32 %v1970, 2147483648
    %v1981 = vsel %vm1979, %v1980, %v1978
    %1982 = vrot.lane.b32.xlu0 %v1783, 42
    %v1983 = vpop.permute.xlu0 %1982
    %v1985 = vmul.f32 %v1981, %v1983
    %1987 = vrot.lane.b32.xlu0 %v1985, 118
    %v1988 = vpop.permute.xlu0 %1987
    %v1990 = vadd.f32 %v1970, %v1988
    %v1991 = vsel %vm1539, %v1990, -inf
    %1992 = vmax.xlane.f32.xlu0 %v1991
    %v1993 = vpop.xlane.xlu0 %1992
    %v1994 = vsub.f32 %v1990, %v1993
    %v1995 = vmul.f32 %v1994, 1.442695
    %v1996 = vpow.pop %v1995
    %v1997 = vsel %vm1539, %v1996, 0.0
    %1998 = vadd.xlane.f32.xlu0 %v1997
    %v1999 = vpop.xlane.xlu0 %1998
    %v2000 = vlog2.pop %v1999
    %v2001 = vmul.f32 %v2000, 0.6931472
    %v2002 = vsub.f32 %v1994, %v2001
    %2004 = vrot.lane.b32.xlu0 %v2002, 20
    %v2005 = vpop.permute.xlu0 %2004
    %vm2007 = vcmask 244896
    %2008 = vst.msk [vmem:[#allocation2] sm:$0xff] %vm2007, %v2005
    // Predicated region
    $region42: #{tpu_custom_call.1} parent=1 // pred_check
      _
    $region43: #{tpu_custom_call.1} parent=1 // pred_check_branch
      %2010 = sbr.rel (0) target = $region45
    $region44: #{tpu_custom_call.1} parent=1 // pred_region
      %s2012 = ssub.s32 128, 128
      %2013 = vsyncadd [#allocation3], %s2012
      %s2015 = sshll.u32 [#allocation2], 4
      %s2016 = int_to_ptr.vmem [resolvable:$true] %s2015
      %2018 = dma.vmem_to_hbm [thread:$0]  %s2016, 128, %s10, [#allocation3]
    $region45: #{tpu_custom_call.1} parent=1 // pred_fallthru
      _
    // Predicated region
    $region46: #{tpu_custom_call.1} parent=1 // pred_check
      _
    $region47: #{tpu_custom_call.1} parent=1 // pred_check_branch
      %2020 = sbr.rel (0) target = $region49
    $region48: #{tpu_custom_call.1} parent=1 // pred_region
      %2021 = dma.done [#allocation3], 128
    $region49: #{tpu_custom_call.1} parent=1 // pred_fallthru
      _
    %2022 = vsyncpa [#allocation3], 1

</llo_original>
